<compile_context>
chip_gen: v5e
topology: v5e:2x2
jax: 0.10.0
libtpu: 0.0.40
codegen_flags: <defaults>
</compile_context>

<pallas_src>
import jax
import jax.numpy as jnp
from jax import lax
from jax.experimental import pallas as pl
from jax.experimental.pallas import tpu as pltpu

BN_EPS = 1e-5


# ----------------------------------------------------------------------------
# Fused kernel: one image per grid step, everything stays in VMEM/registers.
# ----------------------------------------------------------------------------
def decoder_block_kernel(x_ref, skip_ref, wup_ref, bup_ref,
                         w1x_ref, w1s_ref, s1_ref, t1_ref,
                         w2_ref, s2_ref, t2_ref, o_ref):
    # x_ref   : (1, H,  W*Cin)   f32   lane-folded low-res input rows
    # skip_ref: (1, H2, W2*Cs)   f32   lane-folded skip rows (H2 = 2H, W2 = 2W)
    # wup_ref : (2, W*Cin, W2*Cin) bf16 block-diagonal upconv weights (per di)
    # bup_ref : (1, W2*Cin) f32        upconv bias tiled along width
    # w1x/w1s : (3, W2*Csrc, W2*Cout) bf16 banded conv1 weights (x_up / skip part)
    # w2_ref  : (3, W2*Cout, W2*Cout) bf16 banded conv2 weights
    # s*/t*   : (1, W2*Cout) f32       folded BN scale/shift tiled along width
    # o_ref   : (1, H2, W2*Cout) f32   lane-dense output rows
    H2 = o_ref.shape[1]
    H = H2 // 2

    # ---- upconv (ConvTranspose2d k=2 s=2), fused: result never leaves VMEM ----
    # wup_ref[di] columns are ordered (2w+dj)*Cin + cout, so each matmul emits
    # one output-row parity with the 2x width interleave already baked in.
    xrows = x_ref[0].astype(jnp.bfloat16)                            # (H, W*Cin)
    y0 = jnp.dot(xrows, wup_ref[0], preferred_element_type=jnp.float32) + bup_ref[...]
    y1 = jnp.dot(xrows, wup_ref[1], preferred_element_type=jnp.float32) + bup_ref[...]
    # Row-parity interleave: (H, 2, W2*Cin) -> (H2, W2*Cin); cast to bf16 once.
    x_up = jnp.stack([y0, y1], axis=1).reshape(H2, y0.shape[-1]).astype(jnp.bfloat16)

    def band_conv3(rows, w_ref):
        # rows: (H2, W2*Csrc) bf16 lane-folded; w_ref[ky]: banded (W2*Csrc, W2*Cout).
        # Zero padding along W is folded into the weights; the 1-row halo along H
        # is two zero value-rows -> no scratch, no zero-fill stores, no im2col.
        z = jnp.zeros((1, rows.shape[-1]), rows.dtype)
        dn = jnp.concatenate([z, rows[:-1]], axis=0)                 # ky = 0 tap
        up = jnp.concatenate([rows[1:], z], axis=0)                  # ky = 2 tap
        acc = jnp.dot(dn, w_ref[0], preferred_element_type=jnp.float32)
        acc += jnp.dot(rows, w_ref[1], preferred_element_type=jnp.float32)
        acc += jnp.dot(up, w_ref[2], preferred_element_type=jnp.float32)
        return acc                                                   # (H2, W2*Cout) f32

    # conv1: channel concat [x_up ; skip] fused as two banded accumulations.
    skip_rows = skip_ref[0].astype(jnp.bfloat16)
    acc1 = band_conv3(x_up, w1x_ref) + band_conv3(skip_rows, w1s_ref)
    h1 = jnp.maximum(acc1 * s1_ref[...] + t1_ref[...], 0.0)          # BN1 + ReLU

    # conv2 + BN2 + ReLU; conv1 activations never leave VMEM.
    acc2 = band_conv3(h1.astype(jnp.bfloat16), w2_ref)
    y = jnp.maximum(acc2 * s2_ref[...] + t2_ref[...], 0.0)
    o_ref[...] = y.reshape(1, H2, y.shape[-1]).astype(o_ref.dtype)   # lane-dense store


def _decoder_block_pallas(x_rows, skip_rows, wup_bd, bup_t,
                          w1x_b, w1s_b, s1_t, t1_t, w2_b, s2_t, t2_t):
    B, H, WCin = x_rows.shape
    _, H2, W2Cs = skip_rows.shape
    NO = s1_t.shape[-1]                      # W2 * Cout (= 128 here -> lane-dense)

    img3 = lambda b: (b, 0, 0)
    cst3 = lambda b: (0, 0, 0)
    cst2 = lambda b: (0, 0)

    return pl.pallas_call(
        decoder_block_kernel,
        grid=(B,),
        in_specs=[
            pl.BlockSpec((1, H, WCin), img3),
            pl.BlockSpec((1, H2, W2Cs), img3),
            pl.BlockSpec(wup_bd.shape, cst3),
            pl.BlockSpec(bup_t.shape, cst2),
            pl.BlockSpec(w1x_b.shape, cst3),
            pl.BlockSpec(w1s_b.shape, cst3),
            pl.BlockSpec(s1_t.shape, cst2),
            pl.BlockSpec(t1_t.shape, cst2),
            pl.BlockSpec(w2_b.shape, cst3),
            pl.BlockSpec(s2_t.shape, cst2),
            pl.BlockSpec(t2_t.shape, cst2),
        ],
        out_specs=pl.BlockSpec((1, H2, NO), img3),
        out_shape=jax.ShapeDtypeStruct((B, H2, NO), jnp.float32),
        compiler_params=pltpu.CompilerParams(
            dimension_semantics=("parallel",)),
        # TODO(synk): for production decoder sizes add a row-tile grid axis with a
        # 1-row halo (overlapping index_map / manual DMA), fold batch/row-tiles
        # into the matmul M dim, and set vmem_limit_bytes for v7x's 64 MiB VMEM;
        # at these toy sizes one image per step fits trivially.
    )(x_rows, skip_rows, wup_bd, bup_t, w1x_b, w1s_b, s1_t, t1_t, w2_b, s2_t, t2_t)


# ----------------------------------------------------------------------------
# Host-side weight re-layouts (tiny, once per call).
# ----------------------------------------------------------------------------
def _band_conv3x3(w, w2, dtype=jnp.bfloat16):
    """w: (3, 3, Csrc, Cout) conv3x3 (pad=1) weights laid out (ky, kx, cin, cout).

    Returns (3, w2*Csrc, w2*Cout) banded matrices A with
      A[ky, ws*Csrc + c, wo*Cout + co] = w[ky, kx, c, co]  where ws = wo + kx - 1;
    terms with ws outside [0, w2) are dropped (== zero padding along W), so one
    matmul per ky against lane-folded rows computes a whole conv row.
    """
    n_ky, n_kx, csrc, cout = w.shape
    ws = jnp.arange(w2)[None, :, None]
    wo = jnp.arange(w2)[None, None, :]
    kx = jnp.arange(n_kx)[:, None, None]
    ind = (ws == wo + kx - 1).astype(w.dtype)              # (3, w2, w2)
    a = jnp.einsum("kso,ykcd->yscod", ind, w)              # (3, w2, Csrc, w2, Cout)
    return a.reshape(n_ky, w2 * csrc, w2 * cout).astype(dtype)


def _blockdiag_upconv(w, width, dtype=jnp.bfloat16):
    """w: (2, 2, Cin, Cout) ConvTranspose2d(k=2, s=2) weights laid out
    (kh=di, kw=dj, cin, cout).  (PyTorch stores (Cin, Cout, kh, kw); porting
    real weights needs w_pt.permute(2, 3, 0, 1).)

    Returns (2, width*Cin, 2*width*Cout) block-diagonal matrices M with
      M[di, w*Cin + c, (2w+dj)*Cout + co] = w[di, dj, c, co],
    so x_rows (H, width*Cin) @ M[di] emits output-row parity di with the 2x
    width interleave already baked into the column order.
    """
    _, _, cin, cout = w.shape
    eye = jnp.eye(width, dtype=w.dtype)
    m = jnp.einsum("wv,ijcd->iwcvjd", eye, w)              # (2, W, Cin, W, 2, Cout)
    return m.reshape(2, width * cin, width * 2 * cout).astype(dtype)


def _bn_fold(gamma, beta, mean, var):
    scale = gamma / jnp.sqrt(var + BN_EPS)
    return scale, beta - mean * scale


# ----------------------------------------------------------------------------
# Full DecoderBlock forward (NCHW in / NCHW out).
# ----------------------------------------------------------------------------
@jax.jit
def decoder_block_forward(params, x_nchw, skip_nchw):
    x = jnp.transpose(x_nchw, (0, 2, 3, 1))          # NCHW -> NHWC
    skip = jnp.transpose(skip_nchw, (0, 2, 3, 1))
    B, H, W, Cin = x.shape
    _, H2, W2, Cs = skip.shape
    Cout = params["w1"].shape[-1]

    wup_bd = _blockdiag_upconv(params["up_w"], W)                    # (2, W*Cin, W2*Cin)
    bup_t = jnp.tile(params["up_b"], W2).reshape(1, W2 * Cin)
    w1 = params["w1"]
    w1x_b = _band_conv3x3(w1[:, :, :Cin, :], W2)                     # x_up part of concat
    w1s_b = _band_conv3x3(w1[:, :, Cin:, :], W2)                     # skip part of concat
    w2_b = _band_conv3x3(params["w2"], W2)
    s1, t1 = _bn_fold(params["bn1_gamma"], params["bn1_beta"],
                      params["bn1_mean"], params["bn1_var"])
    s2, t2 = _bn_fold(params["bn2_gamma"], params["bn2_beta"],
                      params["bn2_mean"], params["bn2_var"])
    s1_t = jnp.tile(s1, W2).reshape(1, W2 * Cout)
    t1_t = jnp.tile(t1, W2).reshape(1, W2 * Cout)
    s2_t = jnp.tile(s2, W2).reshape(1, W2 * Cout)
    t2_t = jnp.tile(t2, W2).reshape(1, W2 * Cout)

    # lane-folded inputs (contiguity-preserving reshapes of NHWC).
    x_rows = x.reshape(B, H, W * Cin)
    skip_rows = skip.reshape(B, H2, W2 * Cs)

    y = _decoder_block_pallas(x_rows, skip_rows, wup_bd, bup_t,
                              w1x_b, w1s_b, s1_t, t1_t, w2_b, s2_t, t2_t)
    # (B, H2, W2*Cout) row-major == (B, H2, W2, Cout): free reshape, then NCHW.
    return jnp.transpose(y.reshape(B, H2, W2, Cout), (0, 3, 1, 2))


# ----------------------------------------------------------------------------
# Pure-JAX f32 reference (same semantics, HIGHEST precision) for validation.
# ----------------------------------------------------------------------------
def _reference_forward(params, x_nchw, skip_nchw):
    x = jnp.transpose(x_nchw, (0, 2, 3, 1))
    skip = jnp.transpose(skip_nchw, (0, 2, 3, 1))
    B, H, W, Cin = x.shape
    up = jnp.einsum("bhwc,ijcd->bhiwjd", x, params["up_w"],
                    precision=lax.Precision.HIGHEST)
    up = up.reshape(B, 2 * H, 2 * W, Cin) + params["up_b"]
    cat = jnp.concatenate([up, skip], axis=-1)

    def conv3x3(v, w):
        return lax.conv_general_dilated(
            v, w, window_strides=(1, 1), padding=((1, 1), (1, 1)),
            dimension_numbers=("NHWC", "HWIO", "NHWC"),
            precision=lax.Precision.HIGHEST)

    s1, t1 = _bn_fold(params["bn1_gamma"], params["bn1_beta"],
                      params["bn1_mean"], params["bn1_var"])
    s2, t2 = _bn_fold(params["bn2_gamma"], params["bn2_beta"],
                      params["bn2_mean"], params["bn2_var"])
    h = jnp.maximum(conv3x3(cat, params["w1"]) * s1 + t1, 0.0)
    y = jnp.maximum(conv3x3(h, params["w2"]) * s2 + t2, 0.0)
    return jnp.transpose(y, (0, 3, 1, 2))


# ----------------------------------------------------------------------------
# Deterministic synthetic parameters.
# ----------------------------------------------------------------------------
def init_decoder_params(key, in_ch, skip_ch, out_ch):
    cat_ch = in_ch + skip_ch
    ks = jax.random.split(key, 10)
    return {
        # ConvTranspose2d(in_ch, in_ch, 2, 2): stored as (kh, kw, Cin, Cout)
        "up_w": 0.1 * jax.random.normal(ks[0], (2, 2, in_ch, in_ch), jnp.float32),
        "up_b": 0.1 * jax.random.normal(ks[1], (in_ch,), jnp.float32),
        # Conv2d(cat_ch, out_ch, 3, pad=1, bias=False): stored as (3, 3, Cin, Cout)
        "w1": 0.1 * jax.random.normal(ks[2], (3, 3, cat_ch, out_ch), jnp.float32),
        "bn1_gamma": 1.0 + 0.05 * jax.random.normal(ks[3], (out_ch,), jnp.float32),
        "bn1_beta": 0.05 * jax.random.normal(ks[4], (out_ch,), jnp.float32),
        "bn1_mean": 0.05 * jax.random.normal(ks[5], (out_ch,), jnp.float32),
        "bn1_var": jnp.abs(1.0 + 0.05 * jax.random.normal(ks[6], (out_ch,), jnp.float32)),
        # Conv2d(out_ch, out_ch, 3, pad=1, bias=False)
        "w2": 0.1 * jax.random.normal(ks[7], (3, 3, out_ch, out_ch), jnp.float32),
        "bn2_gamma": 1.0 + 0.05 * jax.random.normal(ks[8], (out_ch,), jnp.float32),
        "bn2_beta": 0.05 * jax.random.normal(ks[9], (out_ch,), jnp.float32),
        "bn2_mean": jnp.zeros((out_ch,), jnp.float32),
        "bn2_var": jnp.ones((out_ch,), jnp.float32),
    }


if __name__ == "__main__":
    B, IN_CH, SKIP_CH, OUT_CH, H, W = 2, 8, 4, 8, 8, 8

    key = jax.random.PRNGKey(0)
    k_params, k_x, k_skip = jax.random.split(key, 3)

    params = init_decoder_params(k_params, IN_CH, SKIP_CH, OUT_CH)
    x = jax.random.normal(k_x, (B, IN_CH, H, W), jnp.float32)               # NCHW
    skip = jax.random.normal(k_skip, (B, SKIP_CH, 2 * H, 2 * W), jnp.float32)

    out = jax.block_until_ready(decoder_block_forward(params, x, skip))
    ref = jax.block_until_ready(_reference_forward(params, x, skip))

    assert out.shape == (B, OUT_CH, 2 * H, 2 * W), out.shape
    assert bool(jnp.all(jnp.isfinite(out)))
    # bf16 MXU operands with f32 accumulation -> ~1e-2-level agreement expected.
    assert bool(jnp.allclose(out, ref, atol=5e-2, rtol=5e-2)), float(
        jnp.max(jnp.abs(out - ref)))
    print("KERNEL_OK")
</pallas_src>

<mosaic_0001>
module attributes {stable_mosaic.version = 11 : i64} {
  func.func @decoder_block_kernel(%arg0: i32, %arg1: memref<1x8x64xf32, #tpu.memory_space<vmem>>, %arg2: memref<1x16x64xf32, #tpu.memory_space<vmem>>, %arg3: memref<2x64x128xbf16, #tpu.memory_space<vmem>>, %arg4: memref<1x128xf32, #tpu.memory_space<vmem>>, %arg5: memref<3x128x128xbf16, #tpu.memory_space<vmem>>, %arg6: memref<3x64x128xbf16, #tpu.memory_space<vmem>>, %arg7: memref<1x128xf32, #tpu.memory_space<vmem>>, %arg8: memref<1x128xf32, #tpu.memory_space<vmem>>, %arg9: memref<3x128x128xbf16, #tpu.memory_space<vmem>>, %arg10: memref<1x128xf32, #tpu.memory_space<vmem>>, %arg11: memref<1x128xf32, #tpu.memory_space<vmem>>, %arg12: memref<1x16x128xf32, #tpu.memory_space<vmem>>) attributes {dimension_semantics = [#tpu.dimension_semantics<parallel>], iteration_bounds = array<i64: 2>, scalar_prefetch = 0 : i64, scratch_operands = 0 : i64, tpu.core_type = #tpu.core_type<tc>, window_params = [{transform_indices = @transform_0, window_bounds = array<i64: 1, 8, 64>}, {transform_indices = @transform_1, window_bounds = array<i64: 1, 16, 64>}, {pipeline_mode = #tpu.pipeline_mode<synchronous>, transform_indices = @transform_2, window_bounds = array<i64: 2, 64, 128>}, {pipeline_mode = #tpu.pipeline_mode<synchronous>, transform_indices = @transform_3, window_bounds = array<i64: 1, 128>}, {pipeline_mode = #tpu.pipeline_mode<synchronous>, transform_indices = @transform_4, window_bounds = array<i64: 3, 128, 128>}, {pipeline_mode = #tpu.pipeline_mode<synchronous>, transform_indices = @transform_5, window_bounds = array<i64: 3, 64, 128>}, {pipeline_mode = #tpu.pipeline_mode<synchronous>, transform_indices = @transform_6, window_bounds = array<i64: 1, 128>}, {pipeline_mode = #tpu.pipeline_mode<synchronous>, transform_indices = @transform_7, window_bounds = array<i64: 1, 128>}, {pipeline_mode = #tpu.pipeline_mode<synchronous>, transform_indices = @transform_8, window_bounds = array<i64: 3, 128, 128>}, {pipeline_mode = #tpu.pipeline_mode<synchronous>, transform_indices = @transform_9, window_bounds = array<i64: 1, 128>}, {pipeline_mode = #tpu.pipeline_mode<synchronous>, transform_indices = @transform_10, window_bounds = array<i64: 1, 128>}, {transform_indices = @transform_11, window_bounds = array<i64: 1, 16, 128>}]} {
    %c0 = arith.constant 0 : index
    %c0_0 = arith.constant 0 : index
    %c0_1 = arith.constant 0 : index
    %0 = vector.load %arg1[%c0, %c0_0, %c0_1] : memref<1x8x64xf32, #tpu.memory_space<vmem>>, vector<1x8x64xf32>
    %1 = vector.shape_cast %0 : vector<1x8x64xf32> to vector<8x64xf32>
    %2 = arith.truncf %1 : vector<8x64xf32> to vector<8x64xbf16>
    %c0_2 = arith.constant 0 : index
    %c0_3 = arith.constant 0 : index
    %c0_4 = arith.constant 0 : index
    %3 = vector.load %arg3[%c0_2, %c0_3, %c0_4] : memref<2x64x128xbf16, #tpu.memory_space<vmem>>, vector<1x64x128xbf16>
    %4 = vector.shape_cast %3 : vector<1x64x128xbf16> to vector<64x128xbf16>
    %cst = arith.constant dense<0.000000e+00> : vector<8x128xf32>
    %5 = tpu.matmul %2, %4, %cst {dimension_numbers = #tpu.dot_dimension_numbers<[1], [0], [0], [1], [0, 0, 1, 1], [], []>} : vector<8x64xbf16>, vector<64x128xbf16>, vector<8x128xf32> -> vector<8x128xf32>
    %c0_5 = arith.constant 0 : index
    %c0_6 = arith.constant 0 : index
    %6 = vector.load %arg4[%c0_5, %c0_6] : memref<1x128xf32, #tpu.memory_space<vmem>>, vector<1x128xf32>
    %7 = vector.broadcast %6 : vector<1x128xf32> to vector<8x128xf32>
    %8 = arith.addf %5, %7 : vector<8x128xf32>
    %c1 = arith.constant 1 : index
    %c0_7 = arith.constant 0 : index
    %c0_8 = arith.constant 0 : index
    %9 = vector.load %arg3[%c1, %c0_7, %c0_8] : memref<2x64x128xbf16, #tpu.memory_space<vmem>>, vector<1x64x128xbf16>
    %10 = vector.shape_cast %9 : vector<1x64x128xbf16> to vector<64x128xbf16>
    %cst_9 = arith.constant dense<0.000000e+00> : vector<8x128xf32>
    %11 = tpu.matmul %2, %10, %cst_9 {dimension_numbers = #tpu.dot_dimension_numbers<[1], [0], [0], [1], [0, 0, 1, 1], [], []>} : vector<8x64xbf16>, vector<64x128xbf16>, vector<8x128xf32> -> vector<8x128xf32>
    %c0_10 = arith.constant 0 : index
    %c0_11 = arith.constant 0 : index
    %12 = vector.load %arg4[%c0_10, %c0_11] : memref<1x128xf32, #tpu.memory_space<vmem>>, vector<1x128xf32>
    %13 = vector.broadcast %12 : vector<1x128xf32> to vector<8x128xf32>
    %14 = arith.addf %11, %13 : vector<8x128xf32>
    %15 = vector.shape_cast %8 : vector<8x128xf32> to vector<8x1x128xf32>
    %16 = vector.shape_cast %14 : vector<8x128xf32> to vector<8x1x128xf32>
    %17 = tpu.concatenate %15, %16 in 1 : vector<8x1x128xf32>, vector<8x1x128xf32> -> vector<8x2x128xf32>
    %18 = vector.shape_cast %17 : vector<8x2x128xf32> to vector<16x128xf32>
    %19 = arith.truncf %18 : vector<16x128xf32> to vector<16x128xbf16>
    %c0_12 = arith.constant 0 : index
    %c0_13 = arith.constant 0 : index
    %c0_14 = arith.constant 0 : index
    %20 = vector.load %arg2[%c0_12, %c0_13, %c0_14] : memref<1x16x64xf32, #tpu.memory_space<vmem>>, vector<1x16x64xf32>
    %21 = vector.shape_cast %20 : vector<1x16x64xf32> to vector<16x64xf32>
    %22 = arith.truncf %21 : vector<16x64xf32> to vector<16x64xbf16>
    %cst_15 = arith.constant 0.000000e+00 : bf16
    %23 = vector.broadcast %cst_15 : bf16 to vector<1x128xbf16>
    %24 = vector.extract_strided_slice %19 {offsets = [0, 0], sizes = [15, 128], strides = [1, 1]} : vector<16x128xbf16> to vector<15x128xbf16>
    %25 = tpu.concatenate %23, %24 in 0 : vector<1x128xbf16>, vector<15x128xbf16> -> vector<16x128xbf16>
    %26 = vector.extract_strided_slice %19 {offsets = [1, 0], sizes = [15, 128], strides = [1, 1]} : vector<16x128xbf16> to vector<15x128xbf16>
    %27 = tpu.concatenate %26, %23 in 0 : vector<15x128xbf16>, vector<1x128xbf16> -> vector<16x128xbf16>
    %c0_16 = arith.constant 0 : index
    %c0_17 = arith.constant 0 : index
    %c0_18 = arith.constant 0 : index
    %28 = vector.load %arg5[%c0_16, %c0_17, %c0_18] : memref<3x128x128xbf16, #tpu.memory_space<vmem>>, vector<1x128x128xbf16>
    %29 = vector.shape_cast %28 : vector<1x128x128xbf16> to vector<128x128xbf16>
    %cst_19 = arith.constant dense<0.000000e+00> : vector<16x128xf32>
    %30 = tpu.matmul %25, %29, %cst_19 {dimension_numbers = #tpu.dot_dimension_numbers<[1], [0], [0], [1], [0, 0, 1, 1], [], []>} : vector<16x128xbf16>, vector<128x128xbf16>, vector<16x128xf32> -> vector<16x128xf32>
    %c1_20 = arith.constant 1 : index
    %c0_21 = arith.constant 0 : index
    %c0_22 = arith.constant 0 : index
    %31 = vector.load %arg5[%c1_20, %c0_21, %c0_22] : memref<3x128x128xbf16, #tpu.memory_space<vmem>>, vector<1x128x128xbf16>
    %32 = vector.shape_cast %31 : vector<1x128x128xbf16> to vector<128x128xbf16>
    %cst_23 = arith.constant dense<0.000000e+00> : vector<16x128xf32>
    %33 = tpu.matmul %19, %32, %cst_23 {dimension_numbers = #tpu.dot_dimension_numbers<[1], [0], [0], [1], [0, 0, 1, 1], [], []>} : vector<16x128xbf16>, vector<128x128xbf16>, vector<16x128xf32> -> vector<16x128xf32>
    %34 = arith.addf %30, %33 : vector<16x128xf32>
    %c2 = arith.constant 2 : index
    %c0_24 = arith.constant 0 : index
    %c0_25 = arith.constant 0 : index
    %35 = vector.load %arg5[%c2, %c0_24, %c0_25] : memref<3x128x128xbf16, #tpu.memory_space<vmem>>, vector<1x128x128xbf16>
    %36 = vector.shape_cast %35 : vector<1x128x128xbf16> to vector<128x128xbf16>
    %cst_26 = arith.constant dense<0.000000e+00> : vector<16x128xf32>
    %37 = tpu.matmul %27, %36, %cst_26 {dimension_numbers = #tpu.dot_dimension_numbers<[1], [0], [0], [1], [0, 0, 1, 1], [], []>} : vector<16x128xbf16>, vector<128x128xbf16>, vector<16x128xf32> -> vector<16x128xf32>
    %38 = arith.addf %34, %37 : vector<16x128xf32>
    %cst_27 = arith.constant 0.000000e+00 : bf16
    %39 = vector.broadcast %cst_27 : bf16 to vector<1x64xbf16>
    %40 = vector.extract_strided_slice %22 {offsets = [0, 0], sizes = [15, 64], strides = [1, 1]} : vector<16x64xbf16> to vector<15x64xbf16>
    %41 = tpu.concatenate %39, %40 in 0 : vector<1x64xbf16>, vector<15x64xbf16> -> vector<16x64xbf16>
    %42 = vector.extract_strided_slice %22 {offsets = [1, 0], sizes = [15, 64], strides = [1, 1]} : vector<16x64xbf16> to vector<15x64xbf16>
    %43 = tpu.concatenate %42, %39 in 0 : vector<15x64xbf16>, vector<1x64xbf16> -> vector<16x64xbf16>
    %c0_28 = arith.constant 0 : index
    %c0_29 = arith.constant 0 : index
    %c0_30 = arith.constant 0 : index
    %44 = vector.load %arg6[%c0_28, %c0_29, %c0_30] : memref<3x64x128xbf16, #tpu.memory_space<vmem>>, vector<1x64x128xbf16>
    %45 = vector.shape_cast %44 : vector<1x64x128xbf16> to vector<64x128xbf16>
    %cst_31 = arith.constant dense<0.000000e+00> : vector<16x128xf32>
    %46 = tpu.matmul %41, %45, %cst_31 {dimension_numbers = #tpu.dot_dimension_numbers<[1], [0], [0], [1], [0, 0, 1, 1], [], []>} : vector<16x64xbf16>, vector<64x128xbf16>, vector<16x128xf32> -> vector<16x128xf32>
    %c1_32 = arith.constant 1 : index
    %c0_33 = arith.constant 0 : index
    %c0_34 = arith.constant 0 : index
    %47 = vector.load %arg6[%c1_32, %c0_33, %c0_34] : memref<3x64x128xbf16, #tpu.memory_space<vmem>>, vector<1x64x128xbf16>
    %48 = vector.shape_cast %47 : vector<1x64x128xbf16> to vector<64x128xbf16>
    %cst_35 = arith.constant dense<0.000000e+00> : vector<16x128xf32>
    %49 = tpu.matmul %22, %48, %cst_35 {dimension_numbers = #tpu.dot_dimension_numbers<[1], [0], [0], [1], [0, 0, 1, 1], [], []>} : vector<16x64xbf16>, vector<64x128xbf16>, vector<16x128xf32> -> vector<16x128xf32>
    %50 = arith.addf %46, %49 : vector<16x128xf32>
    %c2_36 = arith.constant 2 : index
    %c0_37 = arith.constant 0 : index
    %c0_38 = arith.constant 0 : index
    %51 = vector.load %arg6[%c2_36, %c0_37, %c0_38] : memref<3x64x128xbf16, #tpu.memory_space<vmem>>, vector<1x64x128xbf16>
    %52 = vector.shape_cast %51 : vector<1x64x128xbf16> to vector<64x128xbf16>
    %cst_39 = arith.constant dense<0.000000e+00> : vector<16x128xf32>
    %53 = tpu.matmul %43, %52, %cst_39 {dimension_numbers = #tpu.dot_dimension_numbers<[1], [0], [0], [1], [0, 0, 1, 1], [], []>} : vector<16x64xbf16>, vector<64x128xbf16>, vector<16x128xf32> -> vector<16x128xf32>
    %54 = arith.addf %50, %53 : vector<16x128xf32>
    %55 = arith.addf %38, %54 : vector<16x128xf32>
    %c0_40 = arith.constant 0 : index
    %c0_41 = arith.constant 0 : index
    %56 = vector.load %arg7[%c0_40, %c0_41] : memref<1x128xf32, #tpu.memory_space<vmem>>, vector<1x128xf32>
    %57 = vector.broadcast %56 : vector<1x128xf32> to vector<16x128xf32>
    %58 = arith.mulf %55, %57 : vector<16x128xf32>
    %c0_42 = arith.constant 0 : index
    %c0_43 = arith.constant 0 : index
    %59 = vector.load %arg8[%c0_42, %c0_43] : memref<1x128xf32, #tpu.memory_space<vmem>>, vector<1x128xf32>
    %60 = vector.broadcast %59 : vector<1x128xf32> to vector<16x128xf32>
    %61 = arith.addf %58, %60 : vector<16x128xf32>
    %cst_44 = arith.constant 0.000000e+00 : f32
    %62 = vector.broadcast %cst_44 : f32 to vector<16x128xf32>
    %63 = arith.maximumf %61, %62 : vector<16x128xf32>
    %64 = arith.truncf %63 : vector<16x128xf32> to vector<16x128xbf16>
    %cst_45 = arith.constant 0.000000e+00 : bf16
    %65 = vector.broadcast %cst_45 : bf16 to vector<1x128xbf16>
    %66 = vector.extract_strided_slice %64 {offsets = [0, 0], sizes = [15, 128], strides = [1, 1]} : vector<16x128xbf16> to vector<15x128xbf16>
    %67 = tpu.concatenate %65, %66 in 0 : vector<1x128xbf16>, vector<15x128xbf16> -> vector<16x128xbf16>
    %68 = vector.extract_strided_slice %64 {offsets = [1, 0], sizes = [15, 128], strides = [1, 1]} : vector<16x128xbf16> to vector<15x128xbf16>
    %69 = tpu.concatenate %68, %65 in 0 : vector<15x128xbf16>, vector<1x128xbf16> -> vector<16x128xbf16>
    %c0_46 = arith.constant 0 : index
    %c0_47 = arith.constant 0 : index
    %c0_48 = arith.constant 0 : index
    %70 = vector.load %arg9[%c0_46, %c0_47, %c0_48] : memref<3x128x128xbf16, #tpu.memory_space<vmem>>, vector<1x128x128xbf16>
    %71 = vector.shape_cast %70 : vector<1x128x128xbf16> to vector<128x128xbf16>
    %cst_49 = arith.constant dense<0.000000e+00> : vector<16x128xf32>
    %72 = tpu.matmul %67, %71, %cst_49 {dimension_numbers = #tpu.dot_dimension_numbers<[1], [0], [0], [1], [0, 0, 1, 1], [], []>} : vector<16x128xbf16>, vector<128x128xbf16>, vector<16x128xf32> -> vector<16x128xf32>
    %c1_50 = arith.constant 1 : index
    %c0_51 = arith.constant 0 : index
    %c0_52 = arith.constant 0 : index
    %73 = vector.load %arg9[%c1_50, %c0_51, %c0_52] : memref<3x128x128xbf16, #tpu.memory_space<vmem>>, vector<1x128x128xbf16>
    %74 = vector.shape_cast %73 : vector<1x128x128xbf16> to vector<128x128xbf16>
    %cst_53 = arith.constant dense<0.000000e+00> : vector<16x128xf32>
    %75 = tpu.matmul %64, %74, %cst_53 {dimension_numbers = #tpu.dot_dimension_numbers<[1], [0], [0], [1], [0, 0, 1, 1], [], []>} : vector<16x128xbf16>, vector<128x128xbf16>, vector<16x128xf32> -> vector<16x128xf32>
    %76 = arith.addf %72, %75 : vector<16x128xf32>
    %c2_54 = arith.constant 2 : index
    %c0_55 = arith.constant 0 : index
    %c0_56 = arith.constant 0 : index
    %77 = vector.load %arg9[%c2_54, %c0_55, %c0_56] : memref<3x128x128xbf16, #tpu.memory_space<vmem>>, vector<1x128x128xbf16>
    %78 = vector.shape_cast %77 : vector<1x128x128xbf16> to vector<128x128xbf16>
    %cst_57 = arith.constant dense<0.000000e+00> : vector<16x128xf32>
    %79 = tpu.matmul %69, %78, %cst_57 {dimension_numbers = #tpu.dot_dimension_numbers<[1], [0], [0], [1], [0, 0, 1, 1], [], []>} : vector<16x128xbf16>, vector<128x128xbf16>, vector<16x128xf32> -> vector<16x128xf32>
    %80 = arith.addf %76, %79 : vector<16x128xf32>
    %c0_58 = arith.constant 0 : index
    %c0_59 = arith.constant 0 : index
    %81 = vector.load %arg10[%c0_58, %c0_59] : memref<1x128xf32, #tpu.memory_space<vmem>>, vector<1x128xf32>
    %82 = vector.broadcast %81 : vector<1x128xf32> to vector<16x128xf32>
    %83 = arith.mulf %80, %82 : vector<16x128xf32>
    %c0_60 = arith.constant 0 : index
    %c0_61 = arith.constant 0 : index
    %84 = vector.load %arg11[%c0_60, %c0_61] : memref<1x128xf32, #tpu.memory_space<vmem>>, vector<1x128xf32>
    %85 = vector.broadcast %84 : vector<1x128xf32> to vector<16x128xf32>
    %86 = arith.addf %83, %85 : vector<16x128xf32>
    %cst_62 = arith.constant 0.000000e+00 : f32
    %87 = vector.broadcast %cst_62 : f32 to vector<16x128xf32>
    %88 = arith.maximumf %86, %87 : vector<16x128xf32>
    %89 = vector.shape_cast %88 : vector<16x128xf32> to vector<1x16x128xf32>
    %c0_63 = arith.constant 0 : index
    %c0_64 = arith.constant 0 : index
    %c0_65 = arith.constant 0 : index
    %90 = vector.load %arg12[%c0_63, %c0_64, %c0_65] : memref<1x16x128xf32, #tpu.memory_space<vmem>>, vector<1x16x128xf32>
    tpu.vector_store %arg12[%c0_63, %c0_64, %c0_65], %89 {strides = array<i32>} : memref<1x16x128xf32, #tpu.memory_space<vmem>>, vector<1x16x128xf32>,
    return
  }
  func.func @transform_0(%arg0: i32) -> (i32, i32, i32) {
    %c0_i32 = arith.constant 0 : i32
    %c0_i32_0 = arith.constant 0 : i32
    %c0_i32_1 = arith.constant 0 : i32
    return %arg0, %c0_i32, %c0_i32_0 : i32, i32, i32
  }
  func.func @transform_1(%arg0: i32) -> (i32, i32, i32) {
    %c0_i32 = arith.constant 0 : i32
    %c0_i32_0 = arith.constant 0 : i32
    %c0_i32_1 = arith.constant 0 : i32
    return %arg0, %c0_i32, %c0_i32_0 : i32, i32, i32
  }
  func.func @transform_2(%arg0: i32) -> (i32, i32, i32) {
    %c0_i32 = arith.constant 0 : i32
    %c0_i32_0 = arith.constant 0 : i32
    %c0_i32_1 = arith.constant 0 : i32
    %c0_i32_2 = arith.constant 0 : i32
    return %c0_i32, %c0_i32_0, %c0_i32_1 : i32, i32, i32
  }
  func.func @transform_3(%arg0: i32) -> (i32, i32) {
    %c0_i32 = arith.constant 0 : i32
    %c0_i32_0 = arith.constant 0 : i32
    %c0_i32_1 = arith.constant 0 : i32
    return %c0_i32, %c0_i32_0 : i32, i32
  }
  func.func @transform_4(%arg0: i32) -> (i32, i32, i32) {
    %c0_i32 = arith.constant 0 : i32
    %c0_i32_0 = arith.constant 0 : i32
    %c0_i32_1 = arith.constant 0 : i32
    %c0_i32_2 = arith.constant 0 : i32
    return %c0_i32, %c0_i32_0, %c0_i32_1 : i32, i32, i32
  }
  func.func @transform_5(%arg0: i32) -> (i32, i32, i32) {
    %c0_i32 = arith.constant 0 : i32
    %c0_i32_0 = arith.constant 0 : i32
    %c0_i32_1 = arith.constant 0 : i32
    %c0_i32_2 = arith.constant 0 : i32
    return %c0_i32, %c0_i32_0, %c0_i32_1 : i32, i32, i32
  }
  func.func @transform_6(%arg0: i32) -> (i32, i32) {
    %c0_i32 = arith.constant 0 : i32
    %c0_i32_0 = arith.constant 0 : i32
    %c0_i32_1 = arith.constant 0 : i32
    return %c0_i32, %c0_i32_0 : i32, i32
  }
  func.func @transform_7(%arg0: i32) -> (i32, i32) {
    %c0_i32 = arith.constant 0 : i32
    %c0_i32_0 = arith.constant 0 : i32
    %c0_i32_1 = arith.constant 0 : i32
    return %c0_i32, %c0_i32_0 : i32, i32
  }
  func.func @transform_8(%arg0: i32) -> (i32, i32, i32) {
    %c0_i32 = arith.constant 0 : i32
    %c0_i32_0 = arith.constant 0 : i32
    %c0_i32_1 = arith.constant 0 : i32
    %c0_i32_2 = arith.constant 0 : i32
    return %c0_i32, %c0_i32_0, %c0_i32_1 : i32, i32, i32
  }
  func.func @transform_9(%arg0: i32) -> (i32, i32) {
    %c0_i32 = arith.constant 0 : i32
    %c0_i32_0 = arith.constant 0 : i32
    %c0_i32_1 = arith.constant 0 : i32
    return %c0_i32, %c0_i32_0 : i32, i32
  }
  func.func @transform_10(%arg0: i32) -> (i32, i32) {
    %c0_i32 = arith.constant 0 : i32
    %c0_i32_0 = arith.constant 0 : i32
    %c0_i32_1 = arith.constant 0 : i32
    return %c0_i32, %c0_i32_0 : i32, i32
  }
  func.func @transform_11(%arg0: i32) -> (i32, i32, i32) {
    %c0_i32 = arith.constant 0 : i32
    %c0_i32_0 = arith.constant 0 : i32
    %c0_i32_1 = arith.constant 0 : i32
    return %arg0, %c0_i32, %c0_i32_0 : i32, i32, i32
  }
}

</mosaic_0001>

<llo_original>
// kernel: tile.33
$region0: #{tile.33}
  #allocation0 [shape = 's32[1]{0}', space=sflag, size = 0x4, scoped, tag = 'scoped memory for tile.33']
  %s0 = inlined_call_operand.vmem [shape: f32[8], index: 0, kind: input, shape index: {}]
  %s1 = inlined_call_operand.vmem [shape: f32[16,8], index: 1, kind: output, shape index: {}]
  // Predicated region
  $region2: #{tile.33} parent=0 // pred_check
    _
  $region3: #{tile.33} parent=0 // pred_check_branch
    %3 = sbr.rel (0) target = $region5
  $region4: #{tile.33} parent=0 // pred_region
    _
  $region5: #{tile.33} parent=0 // pred_fallthru
    _
  %v4 = vld [vmem:[%s0] ss:$0 sm:$0xff]
  %5 = vst [vmem:[%s1] sm:$0xff] %v4
  %s6 = scalar_lea.vmem %s1, 8
  %7 = vst [vmem:[%s6] sm:$0xff] %v4

// kernel: tile.34
$region0: #{tile.34}
  %s0 = inlined_call_operand.vmem [shape: f32[16,8], index: 0, kind: input, shape index: {}]
  %s1 = inlined_call_operand.vmem [shape: f32[1,128], index: 1, kind: output, shape index: {}]
  $region1: #{tile.34} parent=0
    #allocation0 [shape = 'u8[4096]{0}', space=vmem, size = 0x1000, scoped, tag = 'scoped mem for output reshape']
    %v2 = vld [vmem:[%s0] sm:$0x1]
    %vm3 = vcmask 64512
    %4 = vst.msk [vmem:[#allocation0] sm:$0x1] %vm3, %v2
    %s5 = scalar_lea.vmem %s0, 15
    %v6 = vld [vmem:[%s5] sm:$0x1]
    %7 = vrot.lane.b32.xlu0 %v6, 120
    %v8 = vpop.permute.xlu0 %7
    %vm9 = vcmask 1048512
    %10 = vst.msk [vmem:[#allocation0] sm:$0x1] %vm9, %v8
    %s11 = scalar_lea.vmem %s0, 14
    %v12 = vld [vmem:[%s11] sm:$0x1]
    %13 = vrot.lane.b32.xlu0 %v12, 112
    %v14 = vpop.permute.xlu0 %13
    %vm15 = vcmask 982912
    %16 = vst.msk [vmem:[#allocation0] sm:$0x1] %vm15, %v14
    %s17 = scalar_lea.vmem %s0, 13
    %v18 = vld [vmem:[%s17] sm:$0x1]
    %19 = vrot.lane.b32.xlu0 %v18, 104
    %v20 = vpop.permute.xlu0 %19
    %vm21 = vcmask 917312
    %22 = vst.msk [vmem:[#allocation0] sm:$0x1] %vm21, %v20
    %s23 = scalar_lea.vmem %s0, 12
    %v24 = vld [vmem:[%s23] sm:$0x1]
    %25 = vrot.lane.b32.xlu0 %v24, 96
    %v26 = vpop.permute.xlu0 %25
    %vm27 = vcmask 851712
    %28 = vst.msk [vmem:[#allocation0] sm:$0x1] %vm27, %v26
    %s29 = scalar_lea.vmem %s0, 11
    %v30 = vld [vmem:[%s29] sm:$0x1]
    %31 = vrot.lane.b32.xlu0 %v30, 88
    %v32 = vpop.permute.xlu0 %31
    %vm33 = vcmask 786112
    %34 = vst.msk [vmem:[#allocation0] sm:$0x1] %vm33, %v32
    %s35 = scalar_lea.vmem %s0, 10
    %v36 = vld [vmem:[%s35] sm:$0x1]
    %37 = vrot.lane.b32.xlu0 %v36, 80
    %v38 = vpop.permute.xlu0 %37
    %vm39 = vcmask 720512
    %40 = vst.msk [vmem:[#allocation0] sm:$0x1] %vm39, %v38
    %s41 = scalar_lea.vmem %s0, 9
    %v42 = vld [vmem:[%s41] sm:$0x1]
    %43 = vrot.lane.b32.xlu0 %v42, 72
    %v44 = vpop.permute.xlu0 %43
    %vm45 = vcmask 654912
    %46 = vst.msk [vmem:[#allocation0] sm:$0x1] %vm45, %v44
    %s47 = scalar_lea.vmem %s0, 8
    %v48 = vld [vmem:[%s47] sm:$0x1]
    %49 = vrot.lane.b32.xlu0 %v48, 64
    %v50 = vpop.permute.xlu0 %49
    %vm51 = vcmask 589312
    %52 = vst.msk [vmem:[#allocation0] sm:$0x1] %vm51, %v50
    %s53 = scalar_lea.vmem %s0, 7
    %v54 = vld [vmem:[%s53] sm:$0x1]
    %55 = vrot.lane.b32.xlu0 %v54, 56
    %v56 = vpop.permute.xlu0 %55
    %vm57 = vcmask 523712
    %58 = vst.msk [vmem:[#allocation0] sm:$0x1] %vm57, %v56
    %s59 = scalar_lea.vmem %s0, 6
    %v60 = vld [vmem:[%s59] sm:$0x1]
    %61 = vrot.lane.b32.xlu0 %v60, 48
    %v62 = vpop.permute.xlu0 %61
    %vm63 = vcmask 458112
    %64 = vst.msk [vmem:[#allocation0] sm:$0x1] %vm63, %v62
    %s65 = scalar_lea.vmem %s0, 5
    %v66 = vld [vmem:[%s65] sm:$0x1]
    %67 = vrot.lane.b32.xlu0 %v66, 40
    %v68 = vpop.permute.xlu0 %67
    %vm69 = vcmask 392512
    %70 = vst.msk [vmem:[#allocation0] sm:$0x1] %vm69, %v68
    %s71 = scalar_lea.vmem %s0, 4
    %v72 = vld [vmem:[%s71] sm:$0x1]
    %73 = vrot.lane.b32.xlu0 %v72, 32
    %v74 = vpop.permute.xlu0 %73
    %vm75 = vcmask 326912
    %76 = vst.msk [vmem:[#allocation0] sm:$0x1] %vm75, %v74
    %s77 = scalar_lea.vmem %s0, 3
    %v78 = vld [vmem:[%s77] sm:$0x1]
    %79 = vrot.lane.b32.xlu0 %v78, 24
    %v80 = vpop.permute.xlu0 %79
    %vm81 = vcmask 261312
    %82 = vst.msk [vmem:[#allocation0] sm:$0x1] %vm81, %v80
    %s83 = scalar_lea.vmem %s0, 2
    %v84 = vld [vmem:[%s83] sm:$0x1]
    %85 = vrot.lane.b32.xlu0 %v84, 16
    %v86 = vpop.permute.xlu0 %85
    %vm87 = vcmask 195712
    %88 = vst.msk [vmem:[#allocation0] sm:$0x1] %vm87, %v86
    %s89 = scalar_lea.vmem %s0, 1
    %v90 = vld [vmem:[%s89] sm:$0x1]
    %91 = vrot.lane.b32.xlu0 %v90, 8
    %v92 = vpop.permute.xlu0 %91
    %vm93 = vcmask 130112
    %94 = vst.msk [vmem:[#allocation0] sm:$0x1] %vm93, %v92
    %s96 = ssub.s32 2, 1
    %v97 = vld [vmem:[#allocation0] sm:%s96]
    %s99 = ssub.s32 2, 1
    %100 = vst [vmem:[%s1] sm:%s99] %v97

// kernel: decoder_block_forward.1
$region0: #{decoder_block_forward.1}
  #allocation0 [shape = 'u32[]', space=smem, size = 0x4, offset = 0x4, fixed_abs, tag = 'smem constant byte address 0x4 - core index']
  #allocation1 [shape = 'u32[72,128]{1,0:T(1,128)}', space=vmem, size = 0x9000, scoped, tag = 'internal scratch']
  %s0 = inlined_call_operand.vmem [shape: f32[2,8,64], index: 0, kind: input, shape index: {}]
  %s1 = inlined_call_operand.vmem [shape: f32[2,16,64], index: 1, kind: input, shape index: {}]
  %s2 = inlined_call_operand.vmem [shape: bf16[2,64,128], index: 2, kind: input, shape index: {}]
  %s3 = inlined_call_operand.vmem [shape: f32[1,128], index: 3, kind: input, shape index: {}]
  %s4 = inlined_call_operand.vmem [shape: bf16[3,128,128], index: 4, kind: input, shape index: {}]
  %s5 = inlined_call_operand.vmem [shape: bf16[3,64,128], index: 5, kind: input, shape index: {}]
  %s6 = inlined_call_operand.vmem [shape: f32[1,128], index: 6, kind: input, shape index: {}]
  %s7 = inlined_call_operand.vmem [shape: f32[1,128], index: 7, kind: input, shape index: {}]
  %s8 = inlined_call_operand.vmem [shape: bf16[3,128,128], index: 8, kind: input, shape index: {}]
  %s9 = inlined_call_operand.vmem [shape: f32[1,128], index: 9, kind: input, shape index: {}]
  %s10 = inlined_call_operand.vmem [shape: f32[1,128], index: 10, kind: input, shape index: {}]
  %s11 = inlined_call_operand.vmem [shape: f32[2,16,128], index: 11, kind: output, shape index: {}]
  %s12 = sld [smem:[#allocation0]]
  $region77: #{decoder_block_forward.1} parent=0
    _
  %s14 = ssub.s32 1, %s12
  %s15 = scalar_select 0, %s14, %s12
  loop: start=0, step=1, limit=4
  $region2: #{decoder_block_forward.1} parent=0 // loop_pre_header
    _
  $region3: #{decoder_block_forward.1} parent=0 // loop_header
    %s17 = sphi 0, %s21
    %p18 = scmp.ge.s32.totalorder %s17, 4
    %s27 = sphi 0, %s29
    %s30 = sphi 0, %s27
    %s31 = sphi 0, %s30
    %s47 = sphi 0, %s31
    %s53 = sphi 0, %s55
    %s56 = sphi 0, %s53
    %s57 = sphi 0, %s56
    %s73 = sphi 0, %s57
    %s77 = sphi 0, %s77
    %s79 = sphi 0, %s77
    %s80 = sphi 0, %s79
    %s94 = sphi 0, %s80
    %s98 = sphi 0, %s98
    %s100 = sphi 0, %s98
    %s101 = sphi 0, %s100
    %s115 = sphi 0, %s101
    %s119 = sphi 0, %s119
    %s121 = sphi 0, %s119
    %s122 = sphi 0, %s121
    %s136 = sphi 0, %s122
    %s140 = sphi 0, %s140
    %s142 = sphi 0, %s140
    %s143 = sphi 0, %s142
    %s157 = sphi 0, %s143
    %s161 = sphi 0, %s161
    %s163 = sphi 0, %s161
    %s164 = sphi 0, %s163
    %s178 = sphi 0, %s164
    %s182 = sphi 0, %s182
    %s184 = sphi 0, %s182
    %s185 = sphi 0, %s184
    %s199 = sphi 0, %s185
    %s203 = sphi 0, %s203
    %s205 = sphi 0, %s203
    %s206 = sphi 0, %s205
    %s220 = sphi 0, %s206
    %s224 = sphi 0, %s224
    %s226 = sphi 0, %s224
    %s227 = sphi 0, %s226
    %s241 = sphi 0, %s227
    %s245 = sphi 0, %s245
    %s247 = sphi 0, %s245
    %s248 = sphi 0, %s247
    %s262 = sphi 0, %s248
    %s268 = sphi 0, %s270
    %s271 = sphi 0, %s268
    %s272 = sphi 0, %s271
    %s288 = sphi 0, %s272
  $region4: #{decoder_block_forward.1} parent=0 // loop_header_branch
    %20 = sbr.rel (%p18) target = $region8
  $region5: #{decoder_block_forward.1} parent=0 // loop_body
    %s22 = ssub.s32 %s17, 1
    %s23 = ssub.s32 %s17, 2
    %s24 = sadd.s32 %s17, 1
    %s25 = ssub.s32 %s17, %s24
    %p26 = scmp.eq.s32.totalorder %s25, 0
    %s28 = sadd.s32 %s27, 1
    %s29 = scalar_select %p26, %s27, %s28
    %p32 = pneg %p26
    %p33 = scmp.eq.s32.totalorder %s17, 1
    %p34 = por %p32, %p33
    %p35 = scmp.ne.s32.totalorder %s27, %s30
    %p36 = scmp.eq.s32.totalorder %s17, 0
    %p37 = por %p35, %p36
    %p38 = scmp.ne.s32.totalorder %s27, %s30
    %p39 = scmp.eq.s32.totalorder %s22, 1
    %p40 = por %p38, %p39
    %p41 = scmp.ne.s32.totalorder %s30, %s31
    %p42 = scmp.eq.s32.totalorder %s22, 0
    %p43 = por %p41, %p42
    %p44 = scmp.ne.s32.totalorder %s30, %s31
    %p45 = scmp.eq.s32.totalorder %s23, 1
    %p46 = por %p44, %p45
    %p48 = scmp.ne.s32.totalorder %s31, %s47
    %p49 = scmp.eq.s32.totalorder %s23, 0
    %p50 = por %p48, %p49
    %s51 = ssub.s32 %s17, %s24
    %p52 = scmp.eq.s32.totalorder %s51, 0
    %s54 = sadd.s32 %s53, 1
    %s55 = scalar_select %p52, %s53, %s54
    %p58 = pneg %p52
    %p59 = scmp.eq.s32.totalorder %s17, 1
    %p60 = por %p58, %p59
    %p61 = scmp.ne.s32.totalorder %s53, %s56
    %p62 = scmp.eq.s32.totalorder %s17, 0
    %p63 = por %p61, %p62
    %p64 = scmp.ne.s32.totalorder %s53, %s56
    %p65 = scmp.eq.s32.totalorder %s22, 1
    %p66 = por %p64, %p65
    %p67 = scmp.ne.s32.totalorder %s56, %s57
    %p68 = scmp.eq.s32.totalorder %s22, 0
    %p69 = por %p67, %p68
    %p70 = scmp.ne.s32.totalorder %s56, %s57
    %p71 = scmp.eq.s32.totalorder %s23, 1
    %p72 = por %p70, %p71
    %p74 = scmp.ne.s32.totalorder %s57, %s73
    %p75 = scmp.eq.s32.totalorder %s23, 0
    %p76 = por %p74, %p75
    %s78 = sadd.s32 %s77, 1
    %p81 = scmp.eq.s32.totalorder %s17, 1
    %p82 = scmp.ne.s32.totalorder %s77, %s79
    %p83 = scmp.eq.s32.totalorder %s17, 0
    %p84 = por %p82, %p83
    %p85 = scmp.ne.s32.totalorder %s77, %s79
    %p86 = scmp.eq.s32.totalorder %s22, 1
    %p87 = por %p85, %p86
    %p88 = scmp.ne.s32.totalorder %s79, %s80
    %p89 = scmp.eq.s32.totalorder %s22, 0
    %p90 = por %p88, %p89
    %p91 = scmp.ne.s32.totalorder %s79, %s80
    %p92 = scmp.eq.s32.totalorder %s23, 1
    %p93 = por %p91, %p92
    %p95 = scmp.ne.s32.totalorder %s80, %s94
    %p96 = scmp.eq.s32.totalorder %s23, 0
    %p97 = por %p95, %p96
    %s99 = sadd.s32 %s98, 1
    %p102 = scmp.eq.s32.totalorder %s17, 1
    %p103 = scmp.ne.s32.totalorder %s98, %s100
    %p104 = scmp.eq.s32.totalorder %s17, 0
    %p105 = por %p103, %p104
    %p106 = scmp.ne.s32.totalorder %s98, %s100
    %p107 = scmp.eq.s32.totalorder %s22, 1
    %p108 = por %p106, %p107
    %p109 = scmp.ne.s32.totalorder %s100, %s101
    %p110 = scmp.eq.s32.totalorder %s22, 0
    %p111 = por %p109, %p110
    %p112 = scmp.ne.s32.totalorder %s100, %s101
    %p113 = scmp.eq.s32.totalorder %s23, 1
    %p114 = por %p112, %p113
    %p116 = scmp.ne.s32.totalorder %s101, %s115
    %p117 = scmp.eq.s32.totalorder %s23, 0
    %p118 = por %p116, %p117
    %s120 = sadd.s32 %s119, 1
    %p123 = scmp.eq.s32.totalorder %s17, 1
    %p124 = scmp.ne.s32.totalorder %s119, %s121
    %p125 = scmp.eq.s32.totalorder %s17, 0
    %p126 = por %p124, %p125
    %p127 = scmp.ne.s32.totalorder %s119, %s121
    %p128 = scmp.eq.s32.totalorder %s22, 1
    %p129 = por %p127, %p128
    %p130 = scmp.ne.s32.totalorder %s121, %s122
    %p131 = scmp.eq.s32.totalorder %s22, 0
    %p132 = por %p130, %p131
    %p133 = scmp.ne.s32.totalorder %s121, %s122
    %p134 = scmp.eq.s32.totalorder %s23, 1
    %p135 = por %p133, %p134
    %p137 = scmp.ne.s32.totalorder %s122, %s136
    %p138 = scmp.eq.s32.totalorder %s23, 0
    %p139 = por %p137, %p138
    %s141 = sadd.s32 %s140, 1
    %p144 = scmp.eq.s32.totalorder %s17, 1
    %p145 = scmp.ne.s32.totalorder %s140, %s142
    %p146 = scmp.eq.s32.totalorder %s17, 0
    %p147 = por %p145, %p146
    %p148 = scmp.ne.s32.totalorder %s140, %s142
    %p149 = scmp.eq.s32.totalorder %s22, 1
    %p150 = por %p148, %p149
    %p151 = scmp.ne.s32.totalorder %s142, %s143
    %p152 = scmp.eq.s32.totalorder %s22, 0
    %p153 = por %p151, %p152
    %p154 = scmp.ne.s32.totalorder %s142, %s143
    %p155 = scmp.eq.s32.totalorder %s23, 1
    %p156 = por %p154, %p155
    %p158 = scmp.ne.s32.totalorder %s143, %s157
    %p159 = scmp.eq.s32.totalorder %s23, 0
    %p160 = por %p158, %p159
    %s162 = sadd.s32 %s161, 1
    %p165 = scmp.eq.s32.totalorder %s17, 1
    %p166 = scmp.ne.s32.totalorder %s161, %s163
    %p167 = scmp.eq.s32.totalorder %s17, 0
    %p168 = por %p166, %p167
    %p169 = scmp.ne.s32.totalorder %s161, %s163
    %p170 = scmp.eq.s32.totalorder %s22, 1
    %p171 = por %p169, %p170
    %p172 = scmp.ne.s32.totalorder %s163, %s164
    %p173 = scmp.eq.s32.totalorder %s22, 0
    %p174 = por %p172, %p173
    %p175 = scmp.ne.s32.totalorder %s163, %s164
    %p176 = scmp.eq.s32.totalorder %s23, 1
    %p177 = por %p175, %p176
    %p179 = scmp.ne.s32.totalorder %s164, %s178
    %p180 = scmp.eq.s32.totalorder %s23, 0
    %p181 = por %p179, %p180
    %s183 = sadd.s32 %s182, 1
    %p186 = scmp.eq.s32.totalorder %s17, 1
    %p187 = scmp.ne.s32.totalorder %s182, %s184
    %p188 = scmp.eq.s32.totalorder %s17, 0
    %p189 = por %p187, %p188
    %p190 = scmp.ne.s32.totalorder %s182, %s184
    %p191 = scmp.eq.s32.totalorder %s22, 1
    %p192 = por %p190, %p191
    %p193 = scmp.ne.s32.totalorder %s184, %s185
    %p194 = scmp.eq.s32.totalorder %s22, 0
    %p195 = por %p193, %p194
    %p196 = scmp.ne.s32.totalorder %s184, %s185
    %p197 = scmp.eq.s32.totalorder %s23, 1
    %p198 = por %p196, %p197
    %p200 = scmp.ne.s32.totalorder %s185, %s199
    %p201 = scmp.eq.s32.totalorder %s23, 0
    %p202 = por %p200, %p201
    %s204 = sadd.s32 %s203, 1
    %p207 = scmp.eq.s32.totalorder %s17, 1
    %p208 = scmp.ne.s32.totalorder %s203, %s205
    %p209 = scmp.eq.s32.totalorder %s17, 0
    %p210 = por %p208, %p209
    %p211 = scmp.ne.s32.totalorder %s203, %s205
    %p212 = scmp.eq.s32.totalorder %s22, 1
    %p213 = por %p211, %p212
    %p214 = scmp.ne.s32.totalorder %s205, %s206
    %p215 = scmp.eq.s32.totalorder %s22, 0
    %p216 = por %p214, %p215
    %p217 = scmp.ne.s32.totalorder %s205, %s206
    %p218 = scmp.eq.s32.totalorder %s23, 1
    %p219 = por %p217, %p218
    %p221 = scmp.ne.s32.totalorder %s206, %s220
    %p222 = scmp.eq.s32.totalorder %s23, 0
    %p223 = por %p221, %p222
    %s225 = sadd.s32 %s224, 1
    %p228 = scmp.eq.s32.totalorder %s17, 1
    %p229 = scmp.ne.s32.totalorder %s224, %s226
    %p230 = scmp.eq.s32.totalorder %s17, 0
    %p231 = por %p229, %p230
    %p232 = scmp.ne.s32.totalorder %s224, %s226
    %p233 = scmp.eq.s32.totalorder %s22, 1
    %p234 = por %p232, %p233
    %p235 = scmp.ne.s32.totalorder %s226, %s227
    %p236 = scmp.eq.s32.totalorder %s22, 0
    %p237 = por %p235, %p236
    %p238 = scmp.ne.s32.totalorder %s226, %s227
    %p239 = scmp.eq.s32.totalorder %s23, 1
    %p240 = por %p238, %p239
    %p242 = scmp.ne.s32.totalorder %s227, %s241
    %p243 = scmp.eq.s32.totalorder %s23, 0
    %p244 = por %p242, %p243
    %s246 = sadd.s32 %s245, 1
    %p249 = scmp.eq.s32.totalorder %s17, 1
    %p250 = scmp.ne.s32.totalorder %s245, %s247
    %p251 = scmp.eq.s32.totalorder %s17, 0
    %p252 = por %p250, %p251
    %p253 = scmp.ne.s32.totalorder %s245, %s247
    %p254 = scmp.eq.s32.totalorder %s22, 1
    %p255 = por %p253, %p254
    %p256 = scmp.ne.s32.totalorder %s247, %s248
    %p257 = scmp.eq.s32.totalorder %s22, 0
    %p258 = por %p256, %p257
    %p259 = scmp.ne.s32.totalorder %s247, %s248
    %p260 = scmp.eq.s32.totalorder %s23, 1
    %p261 = por %p259, %p260
    %p263 = scmp.ne.s32.totalorder %s248, %s262
    %p264 = scmp.eq.s32.totalorder %s23, 0
    %p265 = por %p263, %p264
    %s266 = ssub.s32 %s17, %s24
    %p267 = scmp.eq.s32.totalorder %s266, 0
    %s269 = sadd.s32 %s268, 1
    %s270 = scalar_select %p267, %s268, %s269
    %p273 = pneg %p267
    %p274 = scmp.eq.s32.totalorder %s17, 1
    %p275 = por %p273, %p274
    %p276 = scmp.ne.s32.totalorder %s268, %s271
    %p277 = scmp.eq.s32.totalorder %s17, 0
    %p278 = por %p276, %p277
    %p279 = scmp.ne.s32.totalorder %s268, %s271
    %p280 = scmp.eq.s32.totalorder %s22, 1
    %p281 = por %p279, %p280
    %p282 = scmp.ne.s32.totalorder %s271, %s272
    %p283 = scmp.eq.s32.totalorder %s22, 0
    %p284 = por %p282, %p283
    %p285 = scmp.ne.s32.totalorder %s271, %s272
    %p286 = scmp.eq.s32.totalorder %s23, 1
    %p287 = por %p285, %p286
    %p289 = scmp.ne.s32.totalorder %s272, %s288
    %p290 = scmp.eq.s32.totalorder %s23, 0
    %p291 = por %p289, %p290
    %p292 = scmp.le.s32.totalorder 1, %s17
    %p293 = scmp.lt.s32.totalorder %s17, 3
    %p294 = pnand %p292, %p293
    %p295 = pneg %p294
    // Predicated region
    $region9: #{decoder_block_forward.1} parent=5 // pred_check
      _
    $region10: #{decoder_block_forward.1} parent=5 // pred_check_branch
      %297 = sbr.rel (%p294) target = $region12
    $region11: #{decoder_block_forward.1} parent=5 // pred_region
      %s298 = ssub.s32 %s17, 1
      // Predicated region
      $region13: #{decoder_block_forward.1} parent=11 // pred_check
        %p299 = pneg %p90
      $region14: #{decoder_block_forward.1} parent=11 // pred_check_branch
        %301 = sbr.rel (%p299) target = $region16
      $region15: #{decoder_block_forward.1} parent=11 // pred_region
        _
      $region16: #{decoder_block_forward.1} parent=11 // pred_fallthru
        _
      // Predicated region
      $region17: #{decoder_block_forward.1} parent=11 // pred_check
        %p302 = pneg %p111
      $region18: #{decoder_block_forward.1} parent=11 // pred_check_branch
        %304 = sbr.rel (%p302) target = $region20
      $region19: #{decoder_block_forward.1} parent=11 // pred_region
        _
      $region20: #{decoder_block_forward.1} parent=11 // pred_fallthru
        _
      // Predicated region
      $region21: #{decoder_block_forward.1} parent=11 // pred_check
        %p305 = pneg %p132
      $region22: #{decoder_block_forward.1} parent=11 // pred_check_branch
        %307 = sbr.rel (%p305) target = $region24
      $region23: #{decoder_block_forward.1} parent=11 // pred_region
        _
      $region24: #{decoder_block_forward.1} parent=11 // pred_fallthru
        _
      // Predicated region
      $region25: #{decoder_block_forward.1} parent=11 // pred_check
        %p308 = pneg %p153
      $region26: #{decoder_block_forward.1} parent=11 // pred_check_branch
        %310 = sbr.rel (%p308) target = $region28
      $region27: #{decoder_block_forward.1} parent=11 // pred_region
        _
      $region28: #{decoder_block_forward.1} parent=11 // pred_fallthru
        _
      // Predicated region
      $region29: #{decoder_block_forward.1} parent=11 // pred_check
        %p311 = pneg %p174
      $region30: #{decoder_block_forward.1} parent=11 // pred_check_branch
        %313 = sbr.rel (%p311) target = $region32
      $region31: #{decoder_block_forward.1} parent=11 // pred_region
        _
      $region32: #{decoder_block_forward.1} parent=11 // pred_fallthru
        _
      // Predicated region
      $region33: #{decoder_block_forward.1} parent=11 // pred_check
        %p314 = pneg %p195
      $region34: #{decoder_block_forward.1} parent=11 // pred_check_branch
        %316 = sbr.rel (%p314) target = $region36
      $region35: #{decoder_block_forward.1} parent=11 // pred_region
        _
      $region36: #{decoder_block_forward.1} parent=11 // pred_fallthru
        _
      // Predicated region
      $region37: #{decoder_block_forward.1} parent=11 // pred_check
        %p317 = pneg %p216
      $region38: #{decoder_block_forward.1} parent=11 // pred_check_branch
        %319 = sbr.rel (%p317) target = $region40
      $region39: #{decoder_block_forward.1} parent=11 // pred_region
        _
      $region40: #{decoder_block_forward.1} parent=11 // pred_fallthru
        _
      // Predicated region
      $region41: #{decoder_block_forward.1} parent=11 // pred_check
        %p320 = pneg %p237
      $region42: #{decoder_block_forward.1} parent=11 // pred_check_branch
        %322 = sbr.rel (%p320) target = $region44
      $region43: #{decoder_block_forward.1} parent=11 // pred_region
        _
      $region44: #{decoder_block_forward.1} parent=11 // pred_fallthru
        _
      // Predicated region
      $region45: #{decoder_block_forward.1} parent=11 // pred_check
        %p323 = pneg %p258
      $region46: #{decoder_block_forward.1} parent=11 // pred_check_branch
        %325 = sbr.rel (%p323) target = $region48
      $region47: #{decoder_block_forward.1} parent=11 // pred_region
        _
      $region48: #{decoder_block_forward.1} parent=11 // pred_fallthru
        _
    $region12: #{decoder_block_forward.1} parent=5 // pred_fallthru
      _
    %p326 = scmp.lt.s32.totalorder %s17, 2
    // Predicated region
    $region49: #{decoder_block_forward.1} parent=5 // pred_check
      %p327 = pneg %p326
    $region50: #{decoder_block_forward.1} parent=5 // pred_check_branch
      %329 = sbr.rel (%p327) target = $region52
    $region51: #{decoder_block_forward.1} parent=5 // pred_region
      // Predicated region
      $region53: #{decoder_block_forward.1} parent=51 // pred_check
        %p330 = pneg %p37
      $region54: #{decoder_block_forward.1} parent=51 // pred_check_branch
        %332 = sbr.rel (%p330) target = $region56
      $region55: #{decoder_block_forward.1} parent=51 // pred_region
        %p333 = scmp.lt.s32.totalorder %s17, 1
        %s334 = scalar_select %p333, %s17, 1
        %s335 = smul.addr %s334, 8
        %s336 = scalar_lea.vmem %s0, %s335
      $region56: #{decoder_block_forward.1} parent=51 // pred_fallthru
        _
      // Predicated region
      $region57: #{decoder_block_forward.1} parent=51 // pred_check
        %p337 = pneg %p63
      $region58: #{decoder_block_forward.1} parent=51 // pred_check_branch
        %339 = sbr.rel (%p337) target = $region60
      $region59: #{decoder_block_forward.1} parent=51 // pred_region
        %p340 = scmp.lt.s32.totalorder %s17, 1
        %s341 = scalar_select %p340, %s17, 1
        %s342 = smul.addr %s341, 2
        %s343 = smul.addr %s342, 8
        %s344 = scalar_lea.vmem %s1, %s343
      $region60: #{decoder_block_forward.1} parent=51 // pred_fallthru
        _
    $region52: #{decoder_block_forward.1} parent=5 // pred_fallthru
      _
    %p345 = scmp.le.s32.totalorder 1, %s17
    %p346 = scmp.lt.s32.totalorder %s17, 3
    %p347 = pnand %p345, %p346
    %p348 = pneg %p347
    // Predicated region
    $region61: #{decoder_block_forward.1} parent=5 // pred_check
      _
    $region62: #{decoder_block_forward.1} parent=5 // pred_check_branch
      %350 = sbr.rel (%p347) target = $region64
    $region63: #{decoder_block_forward.1} parent=5 // pred_region
      %s351 = ssub.s32 %s17, 1
      %p352 = scmp.lt.s32.totalorder %s22, 1
      %s353 = scalar_select %p352, %s22, 1
      %s354 = smul.addr %s353, 8
      %s355 = scalar_lea.vmem %s0, %s354
      %p356 = pneg %p43
      %p357 = pneg %p40
      %p358 = scmp.lt.s32.totalorder %s22, 1
      %s359 = scalar_select %p358, %s22, 1
      %s360 = smul.addr %s359, 2
      %s361 = smul.addr %s360, 8
      %s362 = scalar_lea.vmem %s1, %s361
      %p363 = pneg %p69
      %p364 = pneg %p66
      %p365 = pneg %p90
      %p366 = pneg %p87
      %p367 = pneg %p111
      %p368 = pneg %p108
      %p369 = pneg %p132
      %p370 = pneg %p129
      %p371 = pneg %p153
      %p372 = pneg %p150
      %p373 = pneg %p174
      %p374 = pneg %p171
      %p375 = pneg %p195
      %p376 = pneg %p192
      %p377 = pneg %p216
      %p378 = pneg %p213
      %p379 = pneg %p237
      %p380 = pneg %p234
      %p381 = pneg %p258
      %p382 = pneg %p255
      %p383 = pneg %p284
      %p384 = pneg %p281
      %p385 = scmp.lt.s32.totalorder %s22, 1
      %s386 = scalar_select %p385, %s22, 1
      %s387 = smul.addr %s386, 2
      %s388 = smul.addr %s387, 8
      %s389 = scalar_lea.vmem %s11, %s388
      %p390 = scmp.lt.s32.totalorder %s22, 1
      %s391 = scalar_select %p390, %s22, 1
      %s392 = smul.addr %s391, 8
      %s393 = scalar_lea.vmem %s0, %s392
      %p394 = scmp.lt.s32.totalorder %s22, 1
      %s395 = scalar_select %p394, %s22, 1
      %s396 = smul.addr %s395, 2
      %s397 = smul.addr %s396, 8
      %s398 = scalar_lea.vmem %s1, %s397
      %p399 = scmp.lt.s32.totalorder %s22, 1
      %s400 = scalar_select %p399, %s22, 1
      %s401 = smul.addr %s400, 2
      %s402 = smul.addr %s401, 8
      %s403 = scalar_lea.vmem %s11, %s402
      %v405 = vld [vmem:[%s393] sm:$0xff]
      %v406 = vpack.c.bf16 %v405, %v405
      %v407 = vld [vmem:[%s2] sm:$0xf]
      %v408 = vld [vmem:[%s2 + $0x4] sm:$0xf]
      %v409 = vld [vmem:[%s2 + $0x8] sm:$0xf]
      %v410 = vld [vmem:[%s2 + $0xc] sm:$0xf]
      %v411 = vld [vmem:[%s2 + $0x10] sm:$0xf]
      %v412 = vld [vmem:[%s2 + $0x14] sm:$0xf]
      %v413 = vld [vmem:[%s2 + $0x18] sm:$0xf]
      %v414 = vld [vmem:[%s2 + $0x1c] sm:$0xf]
      %v415 = vld [vmem:[%s3] sm:$0x1]
      %v417 = vperm.slane %v415, 0
      %v427 = vunpack.c.l.b16 %v407
      %v428 = vunpack.c.l.b16 %v408
      %v429 = vunpack.c.l.b16 %v409
      %v430 = vunpack.c.l.b16 %v410
      %v431 = vunpack.c.l.b16 %v411
      %v432 = vunpack.c.l.b16 %v412
      %v433 = vunpack.c.l.b16 %v413
      %v434 = vunpack.c.l.b16 %v414
      %v435 = vpack.c.b16 %v428, %v427
      %v436 = vpack.c.b16 %v430, %v429
      %v437 = vpack.c.b16 %v432, %v431
      %v438 = vpack.c.b16 %v434, %v433
      %vm443 = vcmask 523264
      %v445 = vsel %vm443, %v406, 0
      %447 = vmatpush.bf16.msra.mxu0 0
      %448 = vmatpush.bf16.msra.mxu0 0
      %449 = vmatpush.bf16.msra.mxu0 0
      %450 = vmatpush.bf16.msra.mxu0 0
      %451 = vmatpush.bf16.msra.mxu0 %v438
      %452 = vmatpush.bf16.msra.mxu0 %v437
      %453 = vmatpush.bf16.msra.mxu0 %v436
      %454 = vmatpush.bf16.msra.mxu0 %v435
      %455 = vmatmul.bf16.gmra.mxu0 %v445
      %v456 = vpop.f32.mrf.mxu0
      %v457 = vadd.f32 %v417, %v456
      %v458 = vpop.f32.mrf.mxu0
      %459 = vdwg.mxu0
      %s460 = scalar_lea.vmem %s2, 32
      %v461 = vld [vmem:[%s460] sm:$0xf]
      %v462 = vld [vmem:[%s460 + $0x4] sm:$0xf]
      %v463 = vld [vmem:[%s460 + $0x8] sm:$0xf]
      %v464 = vld [vmem:[%s460 + $0xc] sm:$0xf]
      %v465 = vld [vmem:[%s460 + $0x10] sm:$0xf]
      %v466 = vld [vmem:[%s460 + $0x14] sm:$0xf]
      %v467 = vld [vmem:[%s460 + $0x18] sm:$0xf]
      %v468 = vld [vmem:[%s460 + $0x1c] sm:$0xf]
      %v477 = vunpack.c.l.b16 %v461
      %v478 = vunpack.c.l.b16 %v462
      %v479 = vunpack.c.l.b16 %v463
      %v480 = vunpack.c.l.b16 %v464
      %v481 = vunpack.c.l.b16 %v465
      %v482 = vunpack.c.l.b16 %v466
      %v483 = vunpack.c.l.b16 %v467
      %v484 = vunpack.c.l.b16 %v468
      %v485 = vpack.c.b16 %v478, %v477
      %v486 = vpack.c.b16 %v480, %v479
      %v487 = vpack.c.b16 %v482, %v481
      %v488 = vpack.c.b16 %v484, %v483
      %493 = vmatpush.bf16.msra.mxu0 0
      %494 = vmatpush.bf16.msra.mxu0 0
      %495 = vmatpush.bf16.msra.mxu0 0
      %496 = vmatpush.bf16.msra.mxu0 0
      %497 = vmatpush.bf16.msra.mxu0 %v488
      %498 = vmatpush.bf16.msra.mxu0 %v487
      %499 = vmatpush.bf16.msra.mxu0 %v486
      %500 = vmatpush.bf16.msra.mxu0 %v485
      %501 = vmatmul.bf16.gmra.mxu0 %v445
      %v502 = vpop.f32.mrf.mxu0
      %v503 = vadd.f32 %v417, %v502
      %v504 = vpop.f32.mrf.mxu0
      %505 = vdwg.mxu0
      %v507 = vrot.slane %v457, 1
      %v508 = vrot.slane %v457, 2
      %v509 = vrot.slane %v457, 3
      %v510 = vrot.slane %v457, 4
      %v511 = vrot.slane %v457, 5
      %v512 = vrot.slane %v457, 6
      %v513 = vrot.slane %v457, 7
      %v522 = vrot.slane %v503, 1
      %v523 = vrot.slane %v503, 2
      %v524 = vrot.slane %v503, 3
      %v525 = vrot.slane %v503, 4
      %v526 = vrot.slane %v503, 5
      %v527 = vrot.slane %v503, 6
      %v528 = vrot.slane %v503, 7
      %v529 = vperm.slane %v503, 0
      %v530 = vperm.slane %v522, 0
      %v531 = vperm.slane %v523, 0
      %v532 = vperm.slane %v524, 0
      %v533 = vperm.slane %v525, 0
      %v534 = vperm.slane %v526, 0
      %v535 = vperm.slane %v527, 0
      %v536 = vperm.slane %v528, 0
      %vm545 = vcmask 1040384
      %v546 = vsel %vm545, %v457, %v529
      %v547 = vsel %vm545, %v507, %v530
      %v548 = vsel %vm545, %v508, %v531
      %v549 = vsel %vm545, %v509, %v532
      %v550 = vsel %vm545, %v510, %v533
      %v551 = vsel %vm545, %v511, %v534
      %v552 = vsel %vm545, %v512, %v535
      %v553 = vsel %vm545, %v513, %v536
      %562 = vst [vmem:[#allocation1] ss:$4 sm:$0xff] %v546
      %s563 = scalar_lea.vmem [#allocation1], 1
      %564 = vst [vmem:[%s563] ss:$4 sm:$0xff] %v547
      %s565 = scalar_lea.vmem [#allocation1], 2
      %566 = vst [vmem:[%s565] ss:$4 sm:$0xff] %v548
      %s567 = scalar_lea.vmem [#allocation1], 3
      %568 = vst [vmem:[%s567] ss:$4 sm:$0xff] %v549
      %s569 = scalar_lea.vmem [#allocation1], 32
      %570 = vst [vmem:[%s569] ss:$4 sm:$0xff] %v550
      %s571 = scalar_lea.vmem [#allocation1], 33
      %572 = vst [vmem:[%s571] ss:$4 sm:$0xff] %v551
      %s573 = scalar_lea.vmem [#allocation1], 34
      %574 = vst [vmem:[%s573] ss:$4 sm:$0xff] %v552
      %s575 = scalar_lea.vmem [#allocation1], 35
      %576 = vst [vmem:[%s575] ss:$4 sm:$0xff] %v553
      %v577 = vld.sshfl [vmem:[#allocation1] sm:$0xff pattern:$0x73625140]
      %v578 = vld.sshfl [vmem:[#allocation1 + $0x20] sm:$0xff pattern:$0x73625140]
      %v581 = vpack.c.bf16 %v577, %v577
      %v582 = vpack.c.bf16 %v578, %v578
      %v583 = vld [vmem:[%s398] sm:$0xff]
      %v584 = vld [vmem:[%s398 + $0x8] sm:$0xff]
      %v585 = vpack.c.bf16 %v583, %v583
      %v586 = vpack.c.bf16 %v584, %v584
      %v589 = vunpack.c.l.b16 %v581
      %v590 = vunpack.c.l.b16 %v582
      %v591 = vpack.c.b16 %v590, %v589
      %v593 = vshrl.u32 %v591, 16
      %v595 = vrot.slane %v593, 7
      %v596 = vshll.u32 %v591, 16
      %v598 = vor.u32 %v595, %v596
      %vm600 = vcmask 1040384
      %vm601 = vsmask.f32 256
      %vm602 = vmand %vm600, %vm601
      %v603 = vsel %vm602, 0, %v598
      %v604 = vrot.slane %v596, 1
      %v605 = vor.u32 %v593, %v604
      %vm607 = vcmask 1047552
      %vm608 = vsmask.f32 7424
      %vm609 = vmand %vm607, %vm608
      %v610 = vsel %vm609, %v605, 0
      %v611 = vld [vmem:[%s4] sm:$0xf]
      %v612 = vld [vmem:[%s4 + $0x4] sm:$0xf]
      %v613 = vld [vmem:[%s4 + $0x8] sm:$0xf]
      %v614 = vld [vmem:[%s4 + $0xc] sm:$0xf]
      %v615 = vld [vmem:[%s4 + $0x10] sm:$0xf]
      %v616 = vld [vmem:[%s4 + $0x14] sm:$0xf]
      %v617 = vld [vmem:[%s4 + $0x18] sm:$0xf]
      %v618 = vld [vmem:[%s4 + $0x1c] sm:$0xf]
      %v619 = vld [vmem:[%s4 + $0x20] sm:$0xf]
      %v620 = vld [vmem:[%s4 + $0x24] sm:$0xf]
      %v621 = vld [vmem:[%s4 + $0x28] sm:$0xf]
      %v622 = vld [vmem:[%s4 + $0x2c] sm:$0xf]
      %v623 = vld [vmem:[%s4 + $0x30] sm:$0xf]
      %v624 = vld [vmem:[%s4 + $0x34] sm:$0xf]
      %v625 = vld [vmem:[%s4 + $0x38] sm:$0xf]
      %v626 = vld [vmem:[%s4 + $0x3c] sm:$0xf]
      %s627 = scalar_lea.vmem %s4, 64
      %v628 = vld [vmem:[%s627] sm:$0xf]
      %v629 = vld [vmem:[%s627 + $0x4] sm:$0xf]
      %v630 = vld [vmem:[%s627 + $0x8] sm:$0xf]
      %v631 = vld [vmem:[%s627 + $0xc] sm:$0xf]
      %v632 = vld [vmem:[%s627 + $0x10] sm:$0xf]
      %v633 = vld [vmem:[%s627 + $0x14] sm:$0xf]
      %v634 = vld [vmem:[%s627 + $0x18] sm:$0xf]
      %v635 = vld [vmem:[%s627 + $0x1c] sm:$0xf]
      %v636 = vld [vmem:[%s627 + $0x20] sm:$0xf]
      %v637 = vld [vmem:[%s627 + $0x24] sm:$0xf]
      %v638 = vld [vmem:[%s627 + $0x28] sm:$0xf]
      %v639 = vld [vmem:[%s627 + $0x2c] sm:$0xf]
      %v640 = vld [vmem:[%s627 + $0x30] sm:$0xf]
      %v641 = vld [vmem:[%s627 + $0x34] sm:$0xf]
      %v642 = vld [vmem:[%s627 + $0x38] sm:$0xf]
      %v643 = vld [vmem:[%s627 + $0x3c] sm:$0xf]
      %v661 = vunpack.c.l.b16 %v628
      %v662 = vunpack.c.l.b16 %v629
      %v663 = vunpack.c.l.b16 %v630
      %v664 = vunpack.c.l.b16 %v631
      %v665 = vunpack.c.l.b16 %v632
      %v666 = vunpack.c.l.b16 %v633
      %v667 = vunpack.c.l.b16 %v634
      %v668 = vunpack.c.l.b16 %v635
      %v669 = vunpack.c.l.b16 %v636
      %v670 = vunpack.c.l.b16 %v637
      %v671 = vunpack.c.l.b16 %v638
      %v672 = vunpack.c.l.b16 %v639
      %v673 = vunpack.c.l.b16 %v640
      %v674 = vunpack.c.l.b16 %v641
      %v675 = vunpack.c.l.b16 %v642
      %v676 = vunpack.c.l.b16 %v643
      %v677 = vpack.c.b16 %v662, %v661
      %v678 = vpack.c.b16 %v664, %v663
      %v679 = vpack.c.b16 %v666, %v665
      %v680 = vpack.c.b16 %v668, %v667
      %v681 = vpack.c.b16 %v670, %v669
      %v682 = vpack.c.b16 %v672, %v671
      %v683 = vpack.c.b16 %v674, %v673
      %v684 = vpack.c.b16 %v676, %v675
      %693 = vmatpush.bf16.msra.mxu0 %v684
      %694 = vmatpush.bf16.msra.mxu0 %v683
      %695 = vmatpush.bf16.msra.mxu0 %v682
      %696 = vmatpush.bf16.msra.mxu0 %v681
      %697 = vmatpush.bf16.msra.mxu0 %v680
      %698 = vmatpush.bf16.msra.mxu0 %v679
      %699 = vmatpush.bf16.msra.mxu0 %v678
      %700 = vmatpush.bf16.msra.mxu0 %v677
      %701 = vmatmul.bf16.gmra.mxu0 %v591
      %v702 = vpop.f32.mrf.mxu0
      %v703 = vadd.f32 0.0, %v702
      %v704 = vpop.f32.mrf.mxu0
      %v705 = vadd.f32 0.0, %v704
      %706 = vdwg.mxu0
      %v723 = vunpack.c.l.b16 %v611
      %v724 = vunpack.c.l.b16 %v612
      %v725 = vunpack.c.l.b16 %v613
      %v726 = vunpack.c.l.b16 %v614
      %v727 = vunpack.c.l.b16 %v615
      %v728 = vunpack.c.l.b16 %v616
      %v729 = vunpack.c.l.b16 %v617
      %v730 = vunpack.c.l.b16 %v618
      %v731 = vunpack.c.l.b16 %v619
      %v732 = vunpack.c.l.b16 %v620
      %v733 = vunpack.c.l.b16 %v621
      %v734 = vunpack.c.l.b16 %v622
      %v735 = vunpack.c.l.b16 %v623
      %v736 = vunpack.c.l.b16 %v624
      %v737 = vunpack.c.l.b16 %v625
      %v738 = vunpack.c.l.b16 %v626
      %v739 = vpack.c.b16 %v724, %v723
      %v740 = vpack.c.b16 %v726, %v725
      %v741 = vpack.c.b16 %v728, %v727
      %v742 = vpack.c.b16 %v730, %v729
      %v743 = vpack.c.b16 %v732, %v731
      %v744 = vpack.c.b16 %v734, %v733
      %v745 = vpack.c.b16 %v736, %v735
      %v746 = vpack.c.b16 %v738, %v737
      %755 = vmatpush.bf16.msra.mxu0 %v746
      %756 = vmatpush.bf16.msra.mxu0 %v745
      %757 = vmatpush.bf16.msra.mxu0 %v744
      %758 = vmatpush.bf16.msra.mxu0 %v743
      %759 = vmatpush.bf16.msra.mxu0 %v742
      %760 = vmatpush.bf16.msra.mxu0 %v741
      %761 = vmatpush.bf16.msra.mxu0 %v740
      %762 = vmatpush.bf16.msra.mxu0 %v739
      %763 = vmatmul.bf16.gmra.mxu0 %v603
      %v764 = vpop.f32.mrf.mxu0
      %v765 = vadd.f32 %v703, %v764
      %v766 = vpop.f32.mrf.mxu0
      %v767 = vadd.f32 %v705, %v766
      %768 = vdwg.mxu0
      %s769 = scalar_lea.vmem %s4, 128
      %v770 = vld [vmem:[%s769] sm:$0xf]
      %v771 = vld [vmem:[%s769 + $0x4] sm:$0xf]
      %v772 = vld [vmem:[%s769 + $0x8] sm:$0xf]
      %v773 = vld [vmem:[%s769 + $0xc] sm:$0xf]
      %v774 = vld [vmem:[%s769 + $0x10] sm:$0xf]
      %v775 = vld [vmem:[%s769 + $0x14] sm:$0xf]
      %v776 = vld [vmem:[%s769 + $0x18] sm:$0xf]
      %v777 = vld [vmem:[%s769 + $0x1c] sm:$0xf]
      %v778 = vld [vmem:[%s769 + $0x20] sm:$0xf]
      %v779 = vld [vmem:[%s769 + $0x24] sm:$0xf]
      %v780 = vld [vmem:[%s769 + $0x28] sm:$0xf]
      %v781 = vld [vmem:[%s769 + $0x2c] sm:$0xf]
      %v782 = vld [vmem:[%s769 + $0x30] sm:$0xf]
      %v783 = vld [vmem:[%s769 + $0x34] sm:$0xf]
      %v784 = vld [vmem:[%s769 + $0x38] sm:$0xf]
      %v785 = vld [vmem:[%s769 + $0x3c] sm:$0xf]
      %v802 = vunpack.c.l.b16 %v770
      %v803 = vunpack.c.l.b16 %v771
      %v804 = vunpack.c.l.b16 %v772
      %v805 = vunpack.c.l.b16 %v773
      %v806 = vunpack.c.l.b16 %v774
      %v807 = vunpack.c.l.b16 %v775
      %v808 = vunpack.c.l.b16 %v776
      %v809 = vunpack.c.l.b16 %v777
      %v810 = vunpack.c.l.b16 %v778
      %v811 = vunpack.c.l.b16 %v779
      %v812 = vunpack.c.l.b16 %v780
      %v813 = vunpack.c.l.b16 %v781
      %v814 = vunpack.c.l.b16 %v782
      %v815 = vunpack.c.l.b16 %v783
      %v816 = vunpack.c.l.b16 %v784
      %v817 = vunpack.c.l.b16 %v785
      %v818 = vpack.c.b16 %v803, %v802
      %v819 = vpack.c.b16 %v805, %v804
      %v820 = vpack.c.b16 %v807, %v806
      %v821 = vpack.c.b16 %v809, %v808
      %v822 = vpack.c.b16 %v811, %v810
      %v823 = vpack.c.b16 %v813, %v812
      %v824 = vpack.c.b16 %v815, %v814
      %v825 = vpack.c.b16 %v817, %v816
      %834 = vmatpush.bf16.msra.mxu0 %v825
      %835 = vmatpush.bf16.msra.mxu0 %v824
      %836 = vmatpush.bf16.msra.mxu0 %v823
      %837 = vmatpush.bf16.msra.mxu0 %v822
      %838 = vmatpush.bf16.msra.mxu0 %v821
      %839 = vmatpush.bf16.msra.mxu0 %v820
      %840 = vmatpush.bf16.msra.mxu0 %v819
      %841 = vmatpush.bf16.msra.mxu0 %v818
      %842 = vmatmul.bf16.gmra.mxu0 %v610
      %v843 = vpop.f32.mrf.mxu0
      %v844 = vadd.f32 0.0, %v843
      %v845 = vpop.f32.mrf.mxu0
      %v846 = vadd.f32 0.0, %v845
      %847 = vdwg.mxu0
      %v848 = vadd.f32 %v765, %v844
      %v849 = vadd.f32 %v767, %v846
      %v852 = vunpack.c.l.b16 %v585
      %v853 = vunpack.c.l.b16 %v586
      %v854 = vpack.c.b16 %v853, %v852
      %v856 = vshrl.u32 %v854, 16
      %v858 = vrot.slane %v856, 7
      %v859 = vshll.u32 %v854, 16
      %v861 = vor.u32 %v858, %v859
      %v863 = vsel %vm602, 0, %v861
      %v864 = vrot.slane %v859, 1
      %v865 = vor.u32 %v856, %v864
      %v867 = vsel %vm609, %v865, 0
      %v868 = vld [vmem:[%s5] sm:$0xf]
      %v869 = vld [vmem:[%s5 + $0x4] sm:$0xf]
      %v870 = vld [vmem:[%s5 + $0x8] sm:$0xf]
      %v871 = vld [vmem:[%s5 + $0xc] sm:$0xf]
      %v872 = vld [vmem:[%s5 + $0x10] sm:$0xf]
      %v873 = vld [vmem:[%s5 + $0x14] sm:$0xf]
      %v874 = vld [vmem:[%s5 + $0x18] sm:$0xf]
      %v875 = vld [vmem:[%s5 + $0x1c] sm:$0xf]
      %s876 = scalar_lea.vmem %s5, 32
      %v877 = vld [vmem:[%s876] sm:$0xf]
      %v878 = vld [vmem:[%s876 + $0x4] sm:$0xf]
      %v879 = vld [vmem:[%s876 + $0x8] sm:$0xf]
      %v880 = vld [vmem:[%s876 + $0xc] sm:$0xf]
      %v881 = vld [vmem:[%s876 + $0x10] sm:$0xf]
      %v882 = vld [vmem:[%s876 + $0x14] sm:$0xf]
      %v883 = vld [vmem:[%s876 + $0x18] sm:$0xf]
      %v884 = vld [vmem:[%s876 + $0x1c] sm:$0xf]
      %v893 = vunpack.c.l.b16 %v877
      %v894 = vunpack.c.l.b16 %v878
      %v895 = vunpack.c.l.b16 %v879
      %v896 = vunpack.c.l.b16 %v880
      %v897 = vunpack.c.l.b16 %v881
      %v898 = vunpack.c.l.b16 %v882
      %v899 = vunpack.c.l.b16 %v883
      %v900 = vunpack.c.l.b16 %v884
      %v901 = vpack.c.b16 %v894, %v893
      %v902 = vpack.c.b16 %v896, %v895
      %v903 = vpack.c.b16 %v898, %v897
      %v904 = vpack.c.b16 %v900, %v899
      %v909 = vsel %vm443, %v854, 0
      %911 = vmatpush.bf16.msra.mxu0 0
      %912 = vmatpush.bf16.msra.mxu0 0
      %913 = vmatpush.bf16.msra.mxu0 0
      %914 = vmatpush.bf16.msra.mxu0 0
      %915 = vmatpush.bf16.msra.mxu0 %v904
      %916 = vmatpush.bf16.msra.mxu0 %v903
      %917 = vmatpush.bf16.msra.mxu0 %v902
      %918 = vmatpush.bf16.msra.mxu0 %v901
      %919 = vmatmul.bf16.gmra.mxu0 %v909
      %v920 = vpop.f32.mrf.mxu0
      %v921 = vadd.f32 0.0, %v920
      %v922 = vpop.f32.mrf.mxu0
      %v923 = vadd.f32 0.0, %v922
      %924 = vdwg.mxu0
      %v933 = vunpack.c.l.b16 %v868
      %v934 = vunpack.c.l.b16 %v869
      %v935 = vunpack.c.l.b16 %v870
      %v936 = vunpack.c.l.b16 %v871
      %v937 = vunpack.c.l.b16 %v872
      %v938 = vunpack.c.l.b16 %v873
      %v939 = vunpack.c.l.b16 %v874
      %v940 = vunpack.c.l.b16 %v875
      %v941 = vpack.c.b16 %v934, %v933
      %v942 = vpack.c.b16 %v936, %v935
      %v943 = vpack.c.b16 %v938, %v937
      %v944 = vpack.c.b16 %v940, %v939
      %v950 = vsel %vm443, %v863, 0
      %952 = vmatpush.bf16.msra.mxu0 0
      %953 = vmatpush.bf16.msra.mxu0 0
      %954 = vmatpush.bf16.msra.mxu0 0
      %955 = vmatpush.bf16.msra.mxu0 0
      %956 = vmatpush.bf16.msra.mxu0 %v944
      %957 = vmatpush.bf16.msra.mxu0 %v943
      %958 = vmatpush.bf16.msra.mxu0 %v942
      %959 = vmatpush.bf16.msra.mxu0 %v941
      %960 = vmatmul.bf16.gmra.mxu0 %v950
      %v961 = vpop.f32.mrf.mxu0
      %v962 = vadd.f32 %v921, %v961
      %v963 = vpop.f32.mrf.mxu0
      %v964 = vadd.f32 %v923, %v963
      %965 = vdwg.mxu0
      %s966 = scalar_lea.vmem %s5, 64
      %v967 = vld [vmem:[%s966] sm:$0xf]
      %v968 = vld [vmem:[%s966 + $0x4] sm:$0xf]
      %v969 = vld [vmem:[%s966 + $0x8] sm:$0xf]
      %v970 = vld [vmem:[%s966 + $0xc] sm:$0xf]
      %v971 = vld [vmem:[%s966 + $0x10] sm:$0xf]
      %v972 = vld [vmem:[%s966 + $0x14] sm:$0xf]
      %v973 = vld [vmem:[%s966 + $0x18] sm:$0xf]
      %v974 = vld [vmem:[%s966 + $0x1c] sm:$0xf]
      %v983 = vunpack.c.l.b16 %v967
      %v984 = vunpack.c.l.b16 %v968
      %v985 = vunpack.c.l.b16 %v969
      %v986 = vunpack.c.l.b16 %v970
      %v987 = vunpack.c.l.b16 %v971
      %v988 = vunpack.c.l.b16 %v972
      %v989 = vunpack.c.l.b16 %v973
      %v990 = vunpack.c.l.b16 %v974
      %v991 = vpack.c.b16 %v984, %v983
      %v992 = vpack.c.b16 %v986, %v985
      %v993 = vpack.c.b16 %v988, %v987
      %v994 = vpack.c.b16 %v990, %v989
      %v1000 = vsel %vm443, %v867, 0
      %1002 = vmatpush.bf16.msra.mxu0 0
      %1003 = vmatpush.bf16.msra.mxu0 0
      %1004 = vmatpush.bf16.msra.mxu0 0
      %1005 = vmatpush.bf16.msra.mxu0 0
      %1006 = vmatpush.bf16.msra.mxu0 %v994
      %1007 = vmatpush.bf16.msra.mxu0 %v993
      %1008 = vmatpush.bf16.msra.mxu0 %v992
      %1009 = vmatpush.bf16.msra.mxu0 %v991
      %1010 = vmatmul.bf16.gmra.mxu0 %v1000
      %v1011 = vpop.f32.mrf.mxu0
      %v1012 = vadd.f32 0.0, %v1011
      %v1013 = vpop.f32.mrf.mxu0
      %v1014 = vadd.f32 0.0, %v1013
      %1015 = vdwg.mxu0
      %v1016 = vadd.f32 %v962, %v1012
      %v1017 = vadd.f32 %v964, %v1014
      %v1018 = vadd.f32 %v848, %v1016
      %v1019 = vadd.f32 %v849, %v1017
      %v1020 = vld [vmem:[%s6] sm:$0x1]
      %v1022 = vperm.slane %v1020, 0
      %v1024 = vmul.f32 %v1018, %v1022
      %v1025 = vmul.f32 %v1019, %v1022
      %v1026 = vld [vmem:[%s7] sm:$0x1]
      %v1028 = vperm.slane %v1026, 0
      %v1030 = vadd.f32 %v1024, %v1028
      %v1031 = vadd.f32 %v1025, %v1028
      %v1032 = vmax.f32 %v1030, 0.0
      %v1033 = vmax.f32 %v1031, 0.0
      %v1034 = vpack.c.bf16 %v1032, %v1032
      %v1035 = vpack.c.bf16 %v1033, %v1033
      %v1038 = vunpack.c.l.b16 %v1034
      %v1039 = vunpack.c.l.b16 %v1035
      %v1040 = vpack.c.b16 %v1039, %v1038
      %v1042 = vshrl.u32 %v1040, 16
      %v1044 = vrot.slane %v1042, 7
      %v1045 = vshll.u32 %v1040, 16
      %v1047 = vor.u32 %v1044, %v1045
      %v1049 = vsel %vm602, 0, %v1047
      %v1050 = vrot.slane %v1045, 1
      %v1051 = vor.u32 %v1042, %v1050
      %v1053 = vsel %vm609, %v1051, 0
      %v1054 = vld [vmem:[%s8] sm:$0xf]
      %v1055 = vld [vmem:[%s8 + $0x4] sm:$0xf]
      %v1056 = vld [vmem:[%s8 + $0x8] sm:$0xf]
      %v1057 = vld [vmem:[%s8 + $0xc] sm:$0xf]
      %v1058 = vld [vmem:[%s8 + $0x10] sm:$0xf]
      %v1059 = vld [vmem:[%s8 + $0x14] sm:$0xf]
      %v1060 = vld [vmem:[%s8 + $0x18] sm:$0xf]
      %v1061 = vld [vmem:[%s8 + $0x1c] sm:$0xf]
      %v1062 = vld [vmem:[%s8 + $0x20] sm:$0xf]
      %v1063 = vld [vmem:[%s8 + $0x24] sm:$0xf]
      %v1064 = vld [vmem:[%s8 + $0x28] sm:$0xf]
      %v1065 = vld [vmem:[%s8 + $0x2c] sm:$0xf]
      %v1066 = vld [vmem:[%s8 + $0x30] sm:$0xf]
      %v1067 = vld [vmem:[%s8 + $0x34] sm:$0xf]
      %v1068 = vld [vmem:[%s8 + $0x38] sm:$0xf]
      %v1069 = vld [vmem:[%s8 + $0x3c] sm:$0xf]
      %s1070 = scalar_lea.vmem %s8, 64
      %v1071 = vld [vmem:[%s1070] sm:$0xf]
      %v1072 = vld [vmem:[%s1070 + $0x4] sm:$0xf]
      %v1073 = vld [vmem:[%s1070 + $0x8] sm:$0xf]
      %v1074 = vld [vmem:[%s1070 + $0xc] sm:$0xf]
      %v1075 = vld [vmem:[%s1070 + $0x10] sm:$0xf]
      %v1076 = vld [vmem:[%s1070 + $0x14] sm:$0xf]
      %v1077 = vld [vmem:[%s1070 + $0x18] sm:$0xf]
      %v1078 = vld [vmem:[%s1070 + $0x1c] sm:$0xf]
      %v1079 = vld [vmem:[%s1070 + $0x20] sm:$0xf]
      %v1080 = vld [vmem:[%s1070 + $0x24] sm:$0xf]
      %v1081 = vld [vmem:[%s1070 + $0x28] sm:$0xf]
      %v1082 = vld [vmem:[%s1070 + $0x2c] sm:$0xf]
      %v1083 = vld [vmem:[%s1070 + $0x30] sm:$0xf]
      %v1084 = vld [vmem:[%s1070 + $0x34] sm:$0xf]
      %v1085 = vld [vmem:[%s1070 + $0x38] sm:$0xf]
      %v1086 = vld [vmem:[%s1070 + $0x3c] sm:$0xf]
      %v1104 = vunpack.c.l.b16 %v1071
      %v1105 = vunpack.c.l.b16 %v1072
      %v1106 = vunpack.c.l.b16 %v1073
      %v1107 = vunpack.c.l.b16 %v1074
      %v1108 = vunpack.c.l.b16 %v1075
      %v1109 = vunpack.c.l.b16 %v1076
      %v1110 = vunpack.c.l.b16 %v1077
      %v1111 = vunpack.c.l.b16 %v1078
      %v1112 = vunpack.c.l.b16 %v1079
      %v1113 = vunpack.c.l.b16 %v1080
      %v1114 = vunpack.c.l.b16 %v1081
      %v1115 = vunpack.c.l.b16 %v1082
      %v1116 = vunpack.c.l.b16 %v1083
      %v1117 = vunpack.c.l.b16 %v1084
      %v1118 = vunpack.c.l.b16 %v1085
      %v1119 = vunpack.c.l.b16 %v1086
      %v1120 = vpack.c.b16 %v1105, %v1104
      %v1121 = vpack.c.b16 %v1107, %v1106
      %v1122 = vpack.c.b16 %v1109, %v1108
      %v1123 = vpack.c.b16 %v1111, %v1110
      %v1124 = vpack.c.b16 %v1113, %v1112
      %v1125 = vpack.c.b16 %v1115, %v1114
      %v1126 = vpack.c.b16 %v1117, %v1116
      %v1127 = vpack.c.b16 %v1119, %v1118
      %1136 = vmatpush.bf16.msra.mxu0 %v1127
      %1137 = vmatpush.bf16.msra.mxu0 %v1126
      %1138 = vmatpush.bf16.msra.mxu0 %v1125
      %1139 = vmatpush.bf16.msra.mxu0 %v1124
      %1140 = vmatpush.bf16.msra.mxu0 %v1123
      %1141 = vmatpush.bf16.msra.mxu0 %v1122
      %1142 = vmatpush.bf16.msra.mxu0 %v1121
      %1143 = vmatpush.bf16.msra.mxu0 %v1120
      %1144 = vmatmul.bf16.gmra.mxu0 %v1040
      %v1145 = vpop.f32.mrf.mxu0
      %v1146 = vadd.f32 0.0, %v1145
      %v1147 = vpop.f32.mrf.mxu0
      %v1148 = vadd.f32 0.0, %v1147
      %1149 = vdwg.mxu0
      %v1166 = vunpack.c.l.b16 %v1054
      %v1167 = vunpack.c.l.b16 %v1055
      %v1168 = vunpack.c.l.b16 %v1056
      %v1169 = vunpack.c.l.b16 %v1057
      %v1170 = vunpack.c.l.b16 %v1058
      %v1171 = vunpack.c.l.b16 %v1059
      %v1172 = vunpack.c.l.b16 %v1060
      %v1173 = vunpack.c.l.b16 %v1061
      %v1174 = vunpack.c.l.b16 %v1062
      %v1175 = vunpack.c.l.b16 %v1063
      %v1176 = vunpack.c.l.b16 %v1064
      %v1177 = vunpack.c.l.b16 %v1065
      %v1178 = vunpack.c.l.b16 %v1066
      %v1179 = vunpack.c.l.b16 %v1067
      %v1180 = vunpack.c.l.b16 %v1068
      %v1181 = vunpack.c.l.b16 %v1069
      %v1182 = vpack.c.b16 %v1167, %v1166
      %v1183 = vpack.c.b16 %v1169, %v1168
      %v1184 = vpack.c.b16 %v1171, %v1170
      %v1185 = vpack.c.b16 %v1173, %v1172
      %v1186 = vpack.c.b16 %v1175, %v1174
      %v1187 = vpack.c.b16 %v1177, %v1176
      %v1188 = vpack.c.b16 %v1179, %v1178
      %v1189 = vpack.c.b16 %v1181, %v1180
      %1198 = vmatpush.bf16.msra.mxu0 %v1189
      %1199 = vmatpush.bf16.msra.mxu0 %v1188
      %1200 = vmatpush.bf16.msra.mxu0 %v1187
      %1201 = vmatpush.bf16.msra.mxu0 %v1186
      %1202 = vmatpush.bf16.msra.mxu0 %v1185
      %1203 = vmatpush.bf16.msra.mxu0 %v1184
      %1204 = vmatpush.bf16.msra.mxu0 %v1183
      %1205 = vmatpush.bf16.msra.mxu0 %v1182
      %1206 = vmatmul.bf16.gmra.mxu0 %v1049
      %v1207 = vpop.f32.mrf.mxu0
      %v1208 = vadd.f32 %v1146, %v1207
      %v1209 = vpop.f32.mrf.mxu0
      %v1210 = vadd.f32 %v1148, %v1209
      %1211 = vdwg.mxu0
      %s1212 = scalar_lea.vmem %s8, 128
      %v1213 = vld [vmem:[%s1212] sm:$0xf]
      %v1214 = vld [vmem:[%s1212 + $0x4] sm:$0xf]
      %v1215 = vld [vmem:[%s1212 + $0x8] sm:$0xf]
      %v1216 = vld [vmem:[%s1212 + $0xc] sm:$0xf]
      %v1217 = vld [vmem:[%s1212 + $0x10] sm:$0xf]
      %v1218 = vld [vmem:[%s1212 + $0x14] sm:$0xf]
      %v1219 = vld [vmem:[%s1212 + $0x18] sm:$0xf]
      %v1220 = vld [vmem:[%s1212 + $0x1c] sm:$0xf]
      %v1221 = vld [vmem:[%s1212 + $0x20] sm:$0xf]
      %v1222 = vld [vmem:[%s1212 + $0x24] sm:$0xf]
      %v1223 = vld [vmem:[%s1212 + $0x28] sm:$0xf]
      %v1224 = vld [vmem:[%s1212 + $0x2c] sm:$0xf]
      %v1225 = vld [vmem:[%s1212 + $0x30] sm:$0xf]
      %v1226 = vld [vmem:[%s1212 + $0x34] sm:$0xf]
      %v1227 = vld [vmem:[%s1212 + $0x38] sm:$0xf]
      %v1228 = vld [vmem:[%s1212 + $0x3c] sm:$0xf]
      %v1245 = vunpack.c.l.b16 %v1213
      %v1246 = vunpack.c.l.b16 %v1214
      %v1247 = vunpack.c.l.b16 %v1215
      %v1248 = vunpack.c.l.b16 %v1216
      %v1249 = vunpack.c.l.b16 %v1217
      %v1250 = vunpack.c.l.b16 %v1218
      %v1251 = vunpack.c.l.b16 %v1219
      %v1252 = vunpack.c.l.b16 %v1220
      %v1253 = vunpack.c.l.b16 %v1221
      %v1254 = vunpack.c.l.b16 %v1222
      %v1255 = vunpack.c.l.b16 %v1223
      %v1256 = vunpack.c.l.b16 %v1224
      %v1257 = vunpack.c.l.b16 %v1225
      %v1258 = vunpack.c.l.b16 %v1226
      %v1259 = vunpack.c.l.b16 %v1227
      %v1260 = vunpack.c.l.b16 %v1228
      %v1261 = vpack.c.b16 %v1246, %v1245
      %v1262 = vpack.c.b16 %v1248, %v1247
      %v1263 = vpack.c.b16 %v1250, %v1249
      %v1264 = vpack.c.b16 %v1252, %v1251
      %v1265 = vpack.c.b16 %v1254, %v1253
      %v1266 = vpack.c.b16 %v1256, %v1255
      %v1267 = vpack.c.b16 %v1258, %v1257
      %v1268 = vpack.c.b16 %v1260, %v1259
      %1277 = vmatpush.bf16.msra.mxu0 %v1268
      %1278 = vmatpush.bf16.msra.mxu0 %v1267
      %1279 = vmatpush.bf16.msra.mxu0 %v1266
      %1280 = vmatpush.bf16.msra.mxu0 %v1265
      %1281 = vmatpush.bf16.msra.mxu0 %v1264
      %1282 = vmatpush.bf16.msra.mxu0 %v1263
      %1283 = vmatpush.bf16.msra.mxu0 %v1262
      %1284 = vmatpush.bf16.msra.mxu0 %v1261
      %1285 = vmatmul.bf16.gmra.mxu0 %v1053
      %v1286 = vpop.f32.mrf.mxu0
      %v1287 = vadd.f32 0.0, %v1286
      %v1288 = vpop.f32.mrf.mxu0
      %v1289 = vadd.f32 0.0, %v1288
      %1290 = vdwg.mxu0
      %v1291 = vadd.f32 %v1208, %v1287
      %v1292 = vadd.f32 %v1210, %v1289
      %v1293 = vld [vmem:[%s9] sm:$0x1]
      %v1295 = vperm.slane %v1293, 0
      %v1297 = vmul.f32 %v1291, %v1295
      %v1298 = vmul.f32 %v1292, %v1295
      %v1299 = vld [vmem:[%s10] sm:$0x1]
      %v1301 = vperm.slane %v1299, 0
      %v1303 = vadd.f32 %v1297, %v1301
      %v1304 = vadd.f32 %v1298, %v1301
      %v1305 = vmax.f32 %v1303, 0.0
      %v1306 = vmax.f32 %v1304, 0.0
      %1307 = vst [vmem:[%s403] sm:$0xff] %v1305
      %1308 = vst [vmem:[%s403 + $0x8] sm:$0xff] %v1306
      %p1309 = scmp.lt.s32.totalorder %s22, 1
      %s1310 = scalar_select %p1309, %s22, 1
      %s1311 = smul.addr %s1310, 2
      %s1312 = smul.addr %s1311, 8
      %s1313 = scalar_lea.vmem %s11, %s1312
      // Predicated region
      $region65: #{decoder_block_forward.1} parent=63 // pred_check
        %p1314 = pneg %p281
      $region66: #{decoder_block_forward.1} parent=63 // pred_check_branch
        %1316 = sbr.rel (%p1314) target = $region68
      $region67: #{decoder_block_forward.1} parent=63 // pred_region
        _
      $region68: #{decoder_block_forward.1} parent=63 // pred_fallthru
        _
    $region64: #{decoder_block_forward.1} parent=5 // pred_fallthru
      _
    %p1317 = scmp.le.s32.totalorder 2, %s17
    // Predicated region
    $region69: #{decoder_block_forward.1} parent=5 // pred_check
      %p1318 = pneg %p1317
    $region70: #{decoder_block_forward.1} parent=5 // pred_check_branch
      %1320 = sbr.rel (%p1318) target = $region72
    $region71: #{decoder_block_forward.1} parent=5 // pred_region
      %s1321 = ssub.s32 %s17, 2
      // Predicated region
      $region73: #{decoder_block_forward.1} parent=71 // pred_check
        %p1322 = pneg %p287
      $region74: #{decoder_block_forward.1} parent=71 // pred_check_branch
        %1324 = sbr.rel (%p1322) target = $region76
      $region75: #{decoder_block_forward.1} parent=71 // pred_region
        %p1325 = scmp.lt.s32.totalorder %s23, 1
        %s1326 = scalar_select %p1325, %s23, 1
        %s1327 = smul.addr %s1326, 2
        %s1328 = smul.addr %s1327, 8
        %s1329 = scalar_lea.vmem %s11, %s1328
      $region76: #{decoder_block_forward.1} parent=71 // pred_fallthru
        _
    $region72: #{decoder_block_forward.1} parent=5 // pred_fallthru
      _
  $region6: #{decoder_block_forward.1} parent=0 // loop_footer
    %s21 = sadd.s32 1, %s17
  $region7: #{decoder_block_forward.1} parent=0 // loop_footer_branch
    %16 = sbr.rel target = $region3
  $region8: #{decoder_block_forward.1} parent=0 // loop_exit
    _

</llo_original>
